<compile_context>
chip_gen: v6e
topology: v6e:2x2x1
jax: 0.10.0
libtpu: 0.0.40
codegen_flags: <defaults>
</compile_context>

<pallas_src>
import math

import jax
import jax.numpy as jnp
import numpy as np
from jax.experimental import pallas as pl
from jax.experimental.pallas import tpu as pltpu

H = 16          # hidden_size / d_model
NH = 2          # num_heads
HD = H // NH    # head dim = 8
FF = 16         # dim_feedforward
IN_SIZE = 5     # input_size (embedding vocab)
OUT_SIZE = 5    # output_size
LANES = 128     # lane width of the packed blob / output

# weight-region row offsets in the blob (each region is H=16 rows, lanes start at 0)
(W_EMB, W_SA, W_CQ, W_CK, W_CV, W_CO, W_F1, W_F2, W_FC, W_HM) = tuple(i * H for i in range(10))
W_ROWS = 10 * H

# bias-row indices (stored after the selector / PE / mask regions)
(B_SA, B_CQ, B_CK, B_CV, B_CO, B_N1W, B_N1B, B_N2W, B_N2B,
 B_N3W, B_N3B, B_F1B, B_F2B, B_FCB) = range(14)
N_BIAS = 14


def _pad8(n):
    return max(8, -(-n // 8) * 8)


def _layernorm(x, w, b, eps=1e-5):
    mu = jnp.mean(x, axis=-1, keepdims=True)
    var = jnp.mean((x - mu) ** 2, axis=-1, keepdims=True)
    return (x - mu) * jax.lax.rsqrt(var + eps) * w + b


def gpt_decoder_kernel(y_ref, blob_ref, out_ref):
    """y_ref:   (B_PAD*T, 1) int32 token ids (flat, batch-major, padded batches = 0)
       blob_ref:(rows, 128) packed weights + selector + PE + mask + biases
       out_ref: (B_PAD, 128) lane-dense output (cols >= OUT_SIZE are zero)."""
    BT = y_ref.shape[0]
    B = out_ref.shape[0]
    T = BT // B
    SEL_R = W_ROWS              # (B, BT) target-row selector
    PE_R = SEL_R + B            # (T, H) positional encoding rows
    MSK_R = PE_R + T            # (T, H) additive mask (pre-broadcast across lanes)
    BIAS_R = MSK_R + T          # bias / LayerNorm rows
    f32 = jnp.float32

    def wblk(r, width=H):
        return blob_ref[r:r + H, 0:width]

    def brow(i, width=H):
        return blob_ref[BIAS_R + i:BIAS_R + i + 1, 0:width]

    # ---- embedding lookup as a one-hot matmul, plus positional encoding ----
    ids = y_ref[...]                                                  # (BT, 1) int32
    col = jax.lax.broadcasted_iota(jnp.int32, (BT, H), 1)
    onehot = (ids == col).astype(f32)                                 # cols >= IN_SIZE never hit
    e = jnp.dot(onehot, wblk(W_EMB), preferred_element_type=f32)      # (BT, H)
    e = (e.reshape(B, T, H)
         + blob_ref[PE_R:PE_R + T, 0:H].reshape(1, T, H)).reshape(BT, H)

    # ---- pick the length-1 target (last position of each sequence): host selector matmul ----
    sel = blob_ref[SEL_R:SEL_R + B, 0:BT]                             # (B, BT)
    tgt = jnp.dot(sel, e, preferred_element_type=f32)                 # (B, H)

    # ---- self-attention over one position == plain linear (folded on host) ----
    sa = jnp.dot(tgt, wblk(W_SA), preferred_element_type=f32) + brow(B_SA)
    x = _layernorm(tgt + sa, brow(B_N1W), brow(B_N1B))

    # ---- cross-attention: each target attends over its own batch's T rows ----
    q = jnp.dot(x, wblk(W_CQ), preferred_element_type=f32) + brow(B_CQ)          # (B, H)
    k = (jnp.dot(e, wblk(W_CK), preferred_element_type=f32) + brow(B_CK)).reshape(B, T, H)
    v = (jnp.dot(e, wblk(W_CV), preferred_element_type=f32) + brow(B_CV)).reshape(B, T, H)
    qk = q[:, None, :] * k                                            # (B, T, H)
    # block-diagonal head mask (1/sqrt(HD) folded in): per-head score broadcast on its lanes
    s = jnp.dot(qk.reshape(BT, H), wblk(W_HM),
                preferred_element_type=f32).reshape(B, T, H)
    # additive mask excludes the target row (memory = embedded history positions 0..T-2)
    s = s + blob_ref[MSK_R:MSK_R + T, 0:H].reshape(1, T, H)
    s = s - jnp.max(s, axis=1, keepdims=True)
    p = jnp.exp(s)
    inv = pl.reciprocal(jnp.sum(p, axis=1), approx=True)              # EUP slot, off VPU path
    ca = jnp.sum(p * v, axis=1) * inv                                 # (B, H): heads already concat
    ca = jnp.dot(ca, wblk(W_CO), preferred_element_type=f32) + brow(B_CO)
    x = _layernorm(x + ca, brow(B_N2W), brow(B_N2B))

    # ---- feed-forward ----
    h1 = jnp.maximum(
        jnp.dot(x, wblk(W_F1, FF), preferred_element_type=f32) + brow(B_F1B, FF), 0.0)
    ff = jnp.dot(h1, wblk(W_F2), preferred_element_type=f32) + brow(B_F2B)
    x = _layernorm(x + ff, brow(B_N3W), brow(B_N3B))

    # ---- final fc, full lane-dense (B_PAD, 128) unmasked store ----
    out_ref[...] = (jnp.dot(x, wblk(W_FC, LANES), preferred_element_type=f32)
                    + brow(B_FCB, LANES))


def prepare_params(emb, dec_params, pe, B, T):
    """Host-side, run once: fold self-attn, build selector/mask, pack ONE lane-aligned blob."""
    (sa_wq, sa_wk, sa_wv, sa_bq, sa_bk, sa_bv, sa_wo, sa_bo,
     ca_wq, ca_wk, ca_wv, ca_bq, ca_bk, ca_bv, ca_wo, ca_bo,
     n1_w, n1_b, n2_w, n2_b, n3_w, n3_b,
     ff1_w, ff1_b, ff2_w, ff2_b, fc_w, fc_b) = [np.asarray(a, np.float32) for a in dec_params]
    emb = np.asarray(emb, np.float32)
    pe = np.asarray(pe, np.float32)                       # (max_len, 1, H)
    B_PAD = _pad8(B)
    BT_PAD = B_PAD * T

    # self-attn over a length-1 target: softmax == 1, Q/K dead -> single linear
    W_sa = sa_wv @ sa_wo
    b_sa = sa_bv @ sa_wo + sa_bo
    # block-diagonal head mask with the 1/sqrt(head_dim) scale folded in
    head = np.arange(H) // HD
    hmask = (head[:, None] == head[None, :]).astype(np.float32) / math.sqrt(HD)

    n_rows = -(-(W_ROWS + B_PAD + 2 * T + N_BIAS) // 8) * 8
    blob = np.zeros((n_rows, LANES), np.float32)
    for r, w in ((W_EMB, np.pad(emb, ((0, H - IN_SIZE), (0, 0)))),
                 (W_SA, W_sa), (W_CQ, ca_wq), (W_CK, ca_wk), (W_CV, ca_wv), (W_CO, ca_wo),
                 (W_F1, ff1_w), (W_F2, ff2_w), (W_FC, fc_w), (W_HM, hmask)):
        blob[r:r + w.shape[0], :w.shape[1]] = w

    SEL_R = W_ROWS
    PE_R = SEL_R + B_PAD
    MSK_R = PE_R + T
    BIAS_R = MSK_R + T
    # target-row selector: row b picks flat row b*T + (T-1)
    sel = np.zeros((B_PAD, BT_PAD), np.float32)
    sel[np.arange(B_PAD), np.arange(B_PAD) * T + (T - 1)] = 1.0
    blob[SEL_R:SEL_R + B_PAD, :BT_PAD] = sel
    blob[PE_R:PE_R + T, :H] = pe[:T, 0, :]
    # additive cross-attention mask, pre-broadcast across all H lanes:
    # memory = embedded_history[:-1]  ->  exclude position T-1
    msk = np.zeros((T, H), np.float32)
    msk[T - 1, :] = -1e30
    blob[MSK_R:MSK_R + T, :H] = msk
    for i, vrow in ((B_SA, b_sa), (B_CQ, ca_bq), (B_CK, ca_bk), (B_CV, ca_bv), (B_CO, ca_bo),
                    (B_N1W, n1_w), (B_N1B, n1_b), (B_N2W, n2_w), (B_N2B, n2_b),
                    (B_N3W, n3_w), (B_N3B, n3_b), (B_F1B, ff1_b), (B_F2B, ff2_b),
                    (B_FCB, fc_b)):
        vrow = np.asarray(vrow).reshape(1, -1)
        blob[BIAS_R + i, :vrow.shape[1]] = vrow
    return jnp.asarray(blob)


@jax.jit
def gpt_predictor_forward(x, y_history, blob):
    # The reference forward() also embeds `x` and adds PE, but never uses the result
    # downstream (dead code in the spec); it is intentionally not computed here.
    del x
    B, T = y_history.shape
    B_PAD = _pad8(B)
    BT_PAD = B_PAD * T
    y_pad = jnp.zeros((B_PAD, T), jnp.int32).at[:B, :].set(y_history.astype(jnp.int32))
    y_flat = y_pad.reshape(BT_PAD, 1)

    flops = 2 * (4 * BT_PAD * H * H          # emb, K, V, head-mask scores
                 + B_PAD * BT_PAD * H        # target selector
                 + 3 * B_PAD * H * H         # folded self-attn, Q, cross-attn out
                 + 2 * B_PAD * H * FF        # feed-forward
                 + B_PAD * H * LANES)        # final fc
    # TODO(synk): if B grows beyond toy sizes, add grid=(B_PAD//TB,) with
    # dimension_semantics=("parallel",) to use the second TensorCore on v7x.
    out = pl.pallas_call(
        gpt_decoder_kernel,
        out_shape=jax.ShapeDtypeStruct((B_PAD, LANES), jnp.float32),
        in_specs=[pl.BlockSpec(memory_space=pltpu.MemorySpace.VMEM)] * 2,
        out_specs=pl.BlockSpec(memory_space=pltpu.MemorySpace.VMEM),
        cost_estimate=pl.CostEstimate(
            flops=flops,
            transcendentals=B_PAD * T * H + B_PAD * H,
            bytes_accessed=4 * (blob.size + BT_PAD + B_PAD * LANES)),
    )(y_flat, blob)
    return out[None, :B, :OUT_SIZE]                       # (1, B, OUT_SIZE), seq-first like the reference


def make_positional_encoding(max_len, d_model):
    position = jnp.arange(max_len, dtype=jnp.float32)[:, None]
    div_term = jnp.exp(jnp.arange(0, d_model, 2, dtype=jnp.float32)
                       * (-math.log(10000.0) / d_model))
    pe = jnp.zeros((max_len, d_model), dtype=jnp.float32)
    pe = pe.at[:, 0::2].set(jnp.sin(position * div_term))
    pe = pe.at[:, 1::2].set(jnp.cos(position * div_term))
    return pe[:, None, :]                                 # (max_len, 1, d_model)


def init_params(key):
    keys = iter(jax.random.split(key, 40))

    def rnd(shape, s=0.1):
        return jax.random.normal(next(keys), shape, dtype=jnp.float32) * s

    emb = rnd((IN_SIZE, H), 1.0)
    # attention / linear weights stored pre-transposed: (in, out)
    sa_wq, sa_wk, sa_wv = rnd((H, H)), rnd((H, H)), rnd((H, H))
    sa_bq, sa_bk, sa_bv = rnd((1, H)), rnd((1, H)), rnd((1, H))
    sa_wo, sa_bo = rnd((H, H)), rnd((1, H))
    ca_wq, ca_wk, ca_wv = rnd((H, H)), rnd((H, H)), rnd((H, H))
    ca_bq, ca_bk, ca_bv = rnd((1, H)), rnd((1, H)), rnd((1, H))
    ca_wo, ca_bo = rnd((H, H)), rnd((1, H))
    ones = jnp.ones((1, H), jnp.float32)
    zeros = jnp.zeros((1, H), jnp.float32)
    n1_w, n1_b, n2_w, n2_b, n3_w, n3_b = ones, zeros, ones, zeros, ones, zeros
    ff1_w, ff1_b = rnd((H, FF)), rnd((1, FF))
    ff2_w, ff2_b = rnd((FF, H)), rnd((1, H))
    fc_w, fc_b = rnd((H, OUT_SIZE)), rnd((1, OUT_SIZE))
    dec_params = [sa_wq, sa_wk, sa_wv, sa_bq, sa_bk, sa_bv, sa_wo, sa_bo,
                  ca_wq, ca_wk, ca_wv, ca_bq, ca_bk, ca_bv, ca_wo, ca_bo,
                  n1_w, n1_b, n2_w, n2_b, n3_w, n3_b,
                  ff1_w, ff1_b, ff2_w, ff2_b, fc_w, fc_b]
    return emb, dec_params


if __name__ == "__main__":
    key = jax.random.PRNGKey(0)
    kp, kx, ky = jax.random.split(key, 3)
    emb, dec_params = init_params(kp)
    pe = make_positional_encoding(64, H)

    B, S, T = 2, 8, 8
    blob = prepare_params(emb, dec_params, pe, B, T)      # host-side, once; resident across calls

    x = jax.random.randint(kx, (B, S), 0, IN_SIZE, dtype=jnp.int32)
    y_history = jax.random.randint(ky, (B, T), 0, IN_SIZE, dtype=jnp.int32)

    out = gpt_predictor_forward(x, y_history, blob)
    jax.block_until_ready(out)
    assert out.shape == (1, B, OUT_SIZE) and out.dtype == jnp.float32
    print("KERNEL_OK")
</pallas_src>

<mosaic_0001>
module attributes {stable_mosaic.version = 11 : i64} {
  func.func @gpt_decoder_kernel(%arg0: memref<64x1xi32, #tpu.memory_space<vmem>>, %arg1: memref<200x128xf32, #tpu.memory_space<vmem>>, %arg2: memref<8x128xf32, #tpu.memory_space<vmem>>) attributes {dimension_semantics = [], scalar_prefetch = 0 : i64, scratch_operands = 0 : i64, tpu.core_type = #tpu.core_type<tc>} {
    %c0 = arith.constant 0 : index
    %c0_0 = arith.constant 0 : index
    %0 = vector.load %arg0[%c0, %c0_0] : memref<64x1xi32, #tpu.memory_space<vmem>>, vector<64x1xi32>
    %1 = tpu.iota {dimensions = array<i32: 1>} : vector<64x16xi32>
    %2 = vector.broadcast %0 : vector<64x1xi32> to vector<64x16xi32>
    %3 = arith.cmpi eq, %2, %1 : vector<64x16xi32>
    %4 = arith.extui %3 : vector<64x16xi1> to vector<64x16xi32>
    %5 = arith.sitofp %4 : vector<64x16xi32> to vector<64x16xf32>
    %c0_1 = arith.constant 0 : index
    %c0_2 = arith.constant 0 : index
    %6 = vector.load %arg1[%c0_1, %c0_2] : memref<200x128xf32, #tpu.memory_space<vmem>>, vector<16x16xf32>
    %cst = arith.constant dense<0.000000e+00> : vector<64x16xf32>
    %7 = tpu.matmul %5, %6, %cst {dimension_numbers = #tpu.dot_dimension_numbers<[1], [0], [0], [1], [0, 0, 1, 1], [], []>} : vector<64x16xf32>, vector<16x16xf32>, vector<64x16xf32> -> vector<64x16xf32>
    %8 = vector.shape_cast %7 : vector<64x16xf32> to vector<8x8x16xf32>
    %c168 = arith.constant 168 : index
    %c0_3 = arith.constant 0 : index
    %9 = vector.load %arg1[%c168, %c0_3] : memref<200x128xf32, #tpu.memory_space<vmem>>, vector<8x16xf32>
    %10 = vector.shape_cast %9 : vector<8x16xf32> to vector<1x8x16xf32>
    %11 = vector.broadcast %10 : vector<1x8x16xf32> to vector<8x8x16xf32>
    %12 = arith.addf %8, %11 : vector<8x8x16xf32>
    %13 = vector.shape_cast %12 : vector<8x8x16xf32> to vector<64x16xf32>
    %c160 = arith.constant 160 : index
    %c0_4 = arith.constant 0 : index
    %14 = vector.load %arg1[%c160, %c0_4] : memref<200x128xf32, #tpu.memory_space<vmem>>, vector<8x64xf32>
    %cst_5 = arith.constant dense<0.000000e+00> : vector<8x16xf32>
    %15 = tpu.matmul %14, %13, %cst_5 {dimension_numbers = #tpu.dot_dimension_numbers<[1], [0], [0], [1], [0, 0, 1, 1], [], []>} : vector<8x64xf32>, vector<64x16xf32>, vector<8x16xf32> -> vector<8x16xf32>
    %c16 = arith.constant 16 : index
    %c0_6 = arith.constant 0 : index
    %16 = vector.load %arg1[%c16, %c0_6] : memref<200x128xf32, #tpu.memory_space<vmem>>, vector<16x16xf32>
    %cst_7 = arith.constant dense<0.000000e+00> : vector<8x16xf32>
    %17 = tpu.matmul %15, %16, %cst_7 {dimension_numbers = #tpu.dot_dimension_numbers<[1], [0], [0], [1], [0, 0, 1, 1], [], []>} : vector<8x16xf32>, vector<16x16xf32>, vector<8x16xf32> -> vector<8x16xf32>
    %c184 = arith.constant 184 : index
    %c0_8 = arith.constant 0 : index
    %18 = vector.load %arg1[%c184, %c0_8] : memref<200x128xf32, #tpu.memory_space<vmem>>, vector<1x16xf32>
    %19 = vector.broadcast %18 : vector<1x16xf32> to vector<8x16xf32>
    %20 = arith.addf %17, %19 : vector<8x16xf32>
    %21 = arith.addf %15, %20 : vector<8x16xf32>
    %c189 = arith.constant 189 : index
    %c0_9 = arith.constant 0 : index
    %22 = vector.load %arg1[%c189, %c0_9] : memref<200x128xf32, #tpu.memory_space<vmem>>, vector<1x16xf32>
    %c190 = arith.constant 190 : index
    %c0_10 = arith.constant 0 : index
    %23 = vector.load %arg1[%c190, %c0_10] : memref<200x128xf32, #tpu.memory_space<vmem>>, vector<1x16xf32>
    %cst_11 = arith.constant dense<0.000000e+00> : vector<8xf32>
    %24 = vector.multi_reduction <add>, %21, %cst_11 [1] : vector<8x16xf32> to vector<8xf32>
    %25 = vector.shape_cast %24 : vector<8xf32> to vector<8x1xf32>
    %cst_12 = arith.constant 1.600000e+01 : f32
    %26 = vector.broadcast %cst_12 : f32 to vector<8x1xf32>
    %27 = arith.divf %25, %26 : vector<8x1xf32>
    %28 = vector.broadcast %27 : vector<8x1xf32> to vector<8x16xf32>
    %29 = arith.subf %21, %28 : vector<8x16xf32>
    %30 = arith.mulf %29, %29 : vector<8x16xf32>
    %cst_13 = arith.constant dense<0.000000e+00> : vector<8xf32>
    %31 = vector.multi_reduction <add>, %30, %cst_13 [1] : vector<8x16xf32> to vector<8xf32>
    %32 = vector.shape_cast %31 : vector<8xf32> to vector<8x1xf32>
    %cst_14 = arith.constant 1.600000e+01 : f32
    %33 = vector.broadcast %cst_14 : f32 to vector<8x1xf32>
    %34 = arith.divf %32, %33 : vector<8x1xf32>
    %35 = vector.broadcast %27 : vector<8x1xf32> to vector<8x16xf32>
    %36 = arith.subf %21, %35 : vector<8x16xf32>
    %cst_15 = arith.constant 9.99999974E-6 : f32
    %37 = vector.broadcast %cst_15 : f32 to vector<8x1xf32>
    %38 = arith.addf %34, %37 : vector<8x1xf32>
    %39 = math.rsqrt %38 : vector<8x1xf32>
    %40 = vector.broadcast %39 : vector<8x1xf32> to vector<8x16xf32>
    %41 = arith.mulf %36, %40 : vector<8x16xf32>
    %42 = vector.broadcast %22 : vector<1x16xf32> to vector<8x16xf32>
    %43 = arith.mulf %41, %42 : vector<8x16xf32>
    %44 = vector.broadcast %23 : vector<1x16xf32> to vector<8x16xf32>
    %45 = arith.addf %43, %44 : vector<8x16xf32>
    %c32 = arith.constant 32 : index
    %c0_16 = arith.constant 0 : index
    %46 = vector.load %arg1[%c32, %c0_16] : memref<200x128xf32, #tpu.memory_space<vmem>>, vector<16x16xf32>
    %cst_17 = arith.constant dense<0.000000e+00> : vector<8x16xf32>
    %47 = tpu.matmul %45, %46, %cst_17 {dimension_numbers = #tpu.dot_dimension_numbers<[1], [0], [0], [1], [0, 0, 1, 1], [], []>} : vector<8x16xf32>, vector<16x16xf32>, vector<8x16xf32> -> vector<8x16xf32>
    %c185 = arith.constant 185 : index
    %c0_18 = arith.constant 0 : index
    %48 = vector.load %arg1[%c185, %c0_18] : memref<200x128xf32, #tpu.memory_space<vmem>>, vector<1x16xf32>
    %49 = vector.broadcast %48 : vector<1x16xf32> to vector<8x16xf32>
    %50 = arith.addf %47, %49 : vector<8x16xf32>
    %c48 = arith.constant 48 : index
    %c0_19 = arith.constant 0 : index
    %51 = vector.load %arg1[%c48, %c0_19] : memref<200x128xf32, #tpu.memory_space<vmem>>, vector<16x16xf32>
    %cst_20 = arith.constant dense<0.000000e+00> : vector<64x16xf32>
    %52 = tpu.matmul %13, %51, %cst_20 {dimension_numbers = #tpu.dot_dimension_numbers<[1], [0], [0], [1], [0, 0, 1, 1], [], []>} : vector<64x16xf32>, vector<16x16xf32>, vector<64x16xf32> -> vector<64x16xf32>
    %c186 = arith.constant 186 : index
    %c0_21 = arith.constant 0 : index
    %53 = vector.load %arg1[%c186, %c0_21] : memref<200x128xf32, #tpu.memory_space<vmem>>, vector<1x16xf32>
    %54 = vector.broadcast %53 : vector<1x16xf32> to vector<64x16xf32>
    %55 = arith.addf %52, %54 : vector<64x16xf32>
    %56 = vector.shape_cast %55 : vector<64x16xf32> to vector<8x8x16xf32>
    %c64 = arith.constant 64 : index
    %c0_22 = arith.constant 0 : index
    %57 = vector.load %arg1[%c64, %c0_22] : memref<200x128xf32, #tpu.memory_space<vmem>>, vector<16x16xf32>
    %cst_23 = arith.constant dense<0.000000e+00> : vector<64x16xf32>
    %58 = tpu.matmul %13, %57, %cst_23 {dimension_numbers = #tpu.dot_dimension_numbers<[1], [0], [0], [1], [0, 0, 1, 1], [], []>} : vector<64x16xf32>, vector<16x16xf32>, vector<64x16xf32> -> vector<64x16xf32>
    %c187 = arith.constant 187 : index
    %c0_24 = arith.constant 0 : index
    %59 = vector.load %arg1[%c187, %c0_24] : memref<200x128xf32, #tpu.memory_space<vmem>>, vector<1x16xf32>
    %60 = vector.broadcast %59 : vector<1x16xf32> to vector<64x16xf32>
    %61 = arith.addf %58, %60 : vector<64x16xf32>
    %62 = vector.shape_cast %61 : vector<64x16xf32> to vector<8x8x16xf32>
    %63 = vector.shape_cast %50 : vector<8x16xf32> to vector<8x1x16xf32>
    %64 = vector.broadcast %63 : vector<8x1x16xf32> to vector<8x8x16xf32>
    %65 = arith.mulf %64, %56 : vector<8x8x16xf32>
    %66 = vector.shape_cast %65 : vector<8x8x16xf32> to vector<64x16xf32>
    %c144 = arith.constant 144 : index
    %c0_25 = arith.constant 0 : index
    %67 = vector.load %arg1[%c144, %c0_25] : memref<200x128xf32, #tpu.memory_space<vmem>>, vector<16x16xf32>
    %cst_26 = arith.constant dense<0.000000e+00> : vector<64x16xf32>
    %68 = tpu.matmul %66, %67, %cst_26 {dimension_numbers = #tpu.dot_dimension_numbers<[1], [0], [0], [1], [0, 0, 1, 1], [], []>} : vector<64x16xf32>, vector<16x16xf32>, vector<64x16xf32> -> vector<64x16xf32>
    %69 = vector.shape_cast %68 : vector<64x16xf32> to vector<8x8x16xf32>
    %c176 = arith.constant 176 : index
    %c0_27 = arith.constant 0 : index
    %70 = vector.load %arg1[%c176, %c0_27] : memref<200x128xf32, #tpu.memory_space<vmem>>, vector<8x16xf32>
    %71 = vector.shape_cast %70 : vector<8x16xf32> to vector<1x8x16xf32>
    %72 = vector.broadcast %71 : vector<1x8x16xf32> to vector<8x8x16xf32>
    %73 = arith.addf %69, %72 : vector<8x8x16xf32>
    %cst_28 = arith.constant dense<0xFF800000> : vector<8x16xf32>
    %74 = vector.multi_reduction <maximumf>, %73, %cst_28 [1] : vector<8x8x16xf32> to vector<8x16xf32>
    %75 = vector.shape_cast %74 : vector<8x16xf32> to vector<8x1x16xf32>
    %76 = vector.broadcast %75 : vector<8x1x16xf32> to vector<8x8x16xf32>
    %77 = arith.subf %73, %76 : vector<8x8x16xf32>
    %78 = math.exp %77 : vector<8x8x16xf32>
    %cst_29 = arith.constant dense<0.000000e+00> : vector<8x16xf32>
    %79 = vector.multi_reduction <add>, %78, %cst_29 [1] : vector<8x8x16xf32> to vector<8x16xf32>
    %80 = tpu.reciprocal %79 {approx = true} : vector<8x16xf32> -> vector<8x16xf32>
    %81 = arith.mulf %78, %62 : vector<8x8x16xf32>
    %cst_30 = arith.constant dense<0.000000e+00> : vector<8x16xf32>
    %82 = vector.multi_reduction <add>, %81, %cst_30 [1] : vector<8x8x16xf32> to vector<8x16xf32>
    %83 = arith.mulf %82, %80 : vector<8x16xf32>
    %c80 = arith.constant 80 : index
    %c0_31 = arith.constant 0 : index
    %84 = vector.load %arg1[%c80, %c0_31] : memref<200x128xf32, #tpu.memory_space<vmem>>, vector<16x16xf32>
    %cst_32 = arith.constant dense<0.000000e+00> : vector<8x16xf32>
    %85 = tpu.matmul %83, %84, %cst_32 {dimension_numbers = #tpu.dot_dimension_numbers<[1], [0], [0], [1], [0, 0, 1, 1], [], []>} : vector<8x16xf32>, vector<16x16xf32>, vector<8x16xf32> -> vector<8x16xf32>
    %c188 = arith.constant 188 : index
    %c0_33 = arith.constant 0 : index
    %86 = vector.load %arg1[%c188, %c0_33] : memref<200x128xf32, #tpu.memory_space<vmem>>, vector<1x16xf32>
    %87 = vector.broadcast %86 : vector<1x16xf32> to vector<8x16xf32>
    %88 = arith.addf %85, %87 : vector<8x16xf32>
    %89 = arith.addf %45, %88 : vector<8x16xf32>
    %c191 = arith.constant 191 : index
    %c0_34 = arith.constant 0 : index
    %90 = vector.load %arg1[%c191, %c0_34] : memref<200x128xf32, #tpu.memory_space<vmem>>, vector<1x16xf32>
    %c192 = arith.constant 192 : index
    %c0_35 = arith.constant 0 : index
    %91 = vector.load %arg1[%c192, %c0_35] : memref<200x128xf32, #tpu.memory_space<vmem>>, vector<1x16xf32>
    %cst_36 = arith.constant dense<0.000000e+00> : vector<8xf32>
    %92 = vector.multi_reduction <add>, %89, %cst_36 [1] : vector<8x16xf32> to vector<8xf32>
    %93 = vector.shape_cast %92 : vector<8xf32> to vector<8x1xf32>
    %cst_37 = arith.constant 1.600000e+01 : f32
    %94 = vector.broadcast %cst_37 : f32 to vector<8x1xf32>
    %95 = arith.divf %93, %94 : vector<8x1xf32>
    %96 = vector.broadcast %95 : vector<8x1xf32> to vector<8x16xf32>
    %97 = arith.subf %89, %96 : vector<8x16xf32>
    %98 = arith.mulf %97, %97 : vector<8x16xf32>
    %cst_38 = arith.constant dense<0.000000e+00> : vector<8xf32>
    %99 = vector.multi_reduction <add>, %98, %cst_38 [1] : vector<8x16xf32> to vector<8xf32>
    %100 = vector.shape_cast %99 : vector<8xf32> to vector<8x1xf32>
    %cst_39 = arith.constant 1.600000e+01 : f32
    %101 = vector.broadcast %cst_39 : f32 to vector<8x1xf32>
    %102 = arith.divf %100, %101 : vector<8x1xf32>
    %103 = vector.broadcast %95 : vector<8x1xf32> to vector<8x16xf32>
    %104 = arith.subf %89, %103 : vector<8x16xf32>
    %cst_40 = arith.constant 9.99999974E-6 : f32
    %105 = vector.broadcast %cst_40 : f32 to vector<8x1xf32>
    %106 = arith.addf %102, %105 : vector<8x1xf32>
    %107 = math.rsqrt %106 : vector<8x1xf32>
    %108 = vector.broadcast %107 : vector<8x1xf32> to vector<8x16xf32>
    %109 = arith.mulf %104, %108 : vector<8x16xf32>
    %110 = vector.broadcast %90 : vector<1x16xf32> to vector<8x16xf32>
    %111 = arith.mulf %109, %110 : vector<8x16xf32>
    %112 = vector.broadcast %91 : vector<1x16xf32> to vector<8x16xf32>
    %113 = arith.addf %111, %112 : vector<8x16xf32>
    %c96 = arith.constant 96 : index
    %c0_41 = arith.constant 0 : index
    %114 = vector.load %arg1[%c96, %c0_41] : memref<200x128xf32, #tpu.memory_space<vmem>>, vector<16x16xf32>
    %cst_42 = arith.constant dense<0.000000e+00> : vector<8x16xf32>
    %115 = tpu.matmul %113, %114, %cst_42 {dimension_numbers = #tpu.dot_dimension_numbers<[1], [0], [0], [1], [0, 0, 1, 1], [], []>} : vector<8x16xf32>, vector<16x16xf32>, vector<8x16xf32> -> vector<8x16xf32>
    %c195 = arith.constant 195 : index
    %c0_43 = arith.constant 0 : index
    %116 = vector.load %arg1[%c195, %c0_43] : memref<200x128xf32, #tpu.memory_space<vmem>>, vector<1x16xf32>
    %117 = vector.broadcast %116 : vector<1x16xf32> to vector<8x16xf32>
    %118 = arith.addf %115, %117 : vector<8x16xf32>
    %cst_44 = arith.constant 0.000000e+00 : f32
    %119 = vector.broadcast %cst_44 : f32 to vector<8x16xf32>
    %120 = arith.maximumf %118, %119 : vector<8x16xf32>
    %c112 = arith.constant 112 : index
    %c0_45 = arith.constant 0 : index
    %121 = vector.load %arg1[%c112, %c0_45] : memref<200x128xf32, #tpu.memory_space<vmem>>, vector<16x16xf32>
    %cst_46 = arith.constant dense<0.000000e+00> : vector<8x16xf32>
    %122 = tpu.matmul %120, %121, %cst_46 {dimension_numbers = #tpu.dot_dimension_numbers<[1], [0], [0], [1], [0, 0, 1, 1], [], []>} : vector<8x16xf32>, vector<16x16xf32>, vector<8x16xf32> -> vector<8x16xf32>
    %c196 = arith.constant 196 : index
    %c0_47 = arith.constant 0 : index
    %123 = vector.load %arg1[%c196, %c0_47] : memref<200x128xf32, #tpu.memory_space<vmem>>, vector<1x16xf32>
    %124 = vector.broadcast %123 : vector<1x16xf32> to vector<8x16xf32>
    %125 = arith.addf %122, %124 : vector<8x16xf32>
    %126 = arith.addf %113, %125 : vector<8x16xf32>
    %c193 = arith.constant 193 : index
    %c0_48 = arith.constant 0 : index
    %127 = vector.load %arg1[%c193, %c0_48] : memref<200x128xf32, #tpu.memory_space<vmem>>, vector<1x16xf32>
    %c194 = arith.constant 194 : index
    %c0_49 = arith.constant 0 : index
    %128 = vector.load %arg1[%c194, %c0_49] : memref<200x128xf32, #tpu.memory_space<vmem>>, vector<1x16xf32>
    %cst_50 = arith.constant dense<0.000000e+00> : vector<8xf32>
    %129 = vector.multi_reduction <add>, %126, %cst_50 [1] : vector<8x16xf32> to vector<8xf32>
    %130 = vector.shape_cast %129 : vector<8xf32> to vector<8x1xf32>
    %cst_51 = arith.constant 1.600000e+01 : f32
    %131 = vector.broadcast %cst_51 : f32 to vector<8x1xf32>
    %132 = arith.divf %130, %131 : vector<8x1xf32>
    %133 = vector.broadcast %132 : vector<8x1xf32> to vector<8x16xf32>
    %134 = arith.subf %126, %133 : vector<8x16xf32>
    %135 = arith.mulf %134, %134 : vector<8x16xf32>
    %cst_52 = arith.constant dense<0.000000e+00> : vector<8xf32>
    %136 = vector.multi_reduction <add>, %135, %cst_52 [1] : vector<8x16xf32> to vector<8xf32>
    %137 = vector.shape_cast %136 : vector<8xf32> to vector<8x1xf32>
    %cst_53 = arith.constant 1.600000e+01 : f32
    %138 = vector.broadcast %cst_53 : f32 to vector<8x1xf32>
    %139 = arith.divf %137, %138 : vector<8x1xf32>
    %140 = vector.broadcast %132 : vector<8x1xf32> to vector<8x16xf32>
    %141 = arith.subf %126, %140 : vector<8x16xf32>
    %cst_54 = arith.constant 9.99999974E-6 : f32
    %142 = vector.broadcast %cst_54 : f32 to vector<8x1xf32>
    %143 = arith.addf %139, %142 : vector<8x1xf32>
    %144 = math.rsqrt %143 : vector<8x1xf32>
    %145 = vector.broadcast %144 : vector<8x1xf32> to vector<8x16xf32>
    %146 = arith.mulf %141, %145 : vector<8x16xf32>
    %147 = vector.broadcast %127 : vector<1x16xf32> to vector<8x16xf32>
    %148 = arith.mulf %146, %147 : vector<8x16xf32>
    %149 = vector.broadcast %128 : vector<1x16xf32> to vector<8x16xf32>
    %150 = arith.addf %148, %149 : vector<8x16xf32>
    %c128 = arith.constant 128 : index
    %c0_55 = arith.constant 0 : index
    %151 = vector.load %arg1[%c128, %c0_55] : memref<200x128xf32, #tpu.memory_space<vmem>>, vector<16x128xf32>
    %cst_56 = arith.constant dense<0.000000e+00> : vector<8x128xf32>
    %152 = tpu.matmul %150, %151, %cst_56 {dimension_numbers = #tpu.dot_dimension_numbers<[1], [0], [0], [1], [0, 0, 1, 1], [], []>} : vector<8x16xf32>, vector<16x128xf32>, vector<8x128xf32> -> vector<8x128xf32>
    %c197 = arith.constant 197 : index
    %c0_57 = arith.constant 0 : index
    %153 = vector.load %arg1[%c197, %c0_57] : memref<200x128xf32, #tpu.memory_space<vmem>>, vector<1x128xf32>
    %154 = vector.broadcast %153 : vector<1x128xf32> to vector<8x128xf32>
    %155 = arith.addf %152, %154 : vector<8x128xf32>
    %c0_58 = arith.constant 0 : index
    %c0_59 = arith.constant 0 : index
    %156 = vector.load %arg2[%c0_58, %c0_59] : memref<8x128xf32, #tpu.memory_space<vmem>>, vector<8x128xf32>
    tpu.vector_store %arg2[%c0_58, %c0_59], %155 {strides = array<i32>} : memref<8x128xf32, #tpu.memory_space<vmem>>, vector<8x128xf32>,
    return
  }
}

</mosaic_0001>

<llo_original>
// kernel: gpt_predictor_forward.1
$region0: #{gpt_predictor_forward.1}
  #allocation0 [shape = 'u32[]', space=smem, size = 0x4, offset = 0x4, fixed_abs, tag = 'smem constant byte address 0x4 - core index']
  #allocation1 [shape = 'u32[144,128]{1,0:T(1,128)}', space=vmem, size = 0x12000, scoped, tag = 'internal scratch']
  %s0 = inlined_call_operand.vmem [shape: s32[64,1], index: 0, kind: input, shape index: {}]
  %s1 = inlined_call_operand.hbm [shape: f32[200,128], index: 1, kind: input, shape index: {}]
  %s2 = inlined_call_operand.vmem [shape: f32[8,128], index: 2, kind: output, shape index: {}]
  %s3 = sld [smem:[#allocation0]]
  $region22: #{gpt_predictor_forward.1} parent=0
    _
  %s5 = ssub.s32 1, %s3
  %s6 = scalar_select 0, %s5, %s3
  $region1: #{gpt_predictor_forward.1} parent=0
    #allocation2 [shape = 'u8[102400]{0}', space=vmem, size = 0x19000, scoped, tag = 'input window, operand 1, single buffered']
    #allocation3 [shape = 's32[1]{0}', space=sflag, size = 0x4, scoped, tag = 'scoped memory for gpt_predictor_forward.1']
    %7 = vsyncpa [#allocation3], 0
    // Predicated region
    $region2: #{gpt_predictor_forward.1} parent=1 // pred_check
      _
    $region3: #{gpt_predictor_forward.1} parent=1 // pred_check_branch
      %9 = sbr.rel (0) target = $region5
    $region4: #{gpt_predictor_forward.1} parent=1 // pred_region
      _
    $region5: #{gpt_predictor_forward.1} parent=1 // pred_fallthru
      _
    // Predicated region
    $region6: #{gpt_predictor_forward.1} parent=1 // pred_check
      _
    $region7: #{gpt_predictor_forward.1} parent=1 // pred_check_branch
      %11 = sbr.rel (0) target = $region9
    $region8: #{gpt_predictor_forward.1} parent=1 // pred_region
      %s13 = ssub.s32 3200, 3200
      %14 = vsyncadd [#allocation3], %s13
      %s15 = sshll.u32 [#allocation2], 4
      %s16 = int_to_ptr.vmem [resolvable:$true] %s15
      %21 = dma.hbm_to_vmem [thread:$0]  %s1, 3200, %s16, [#allocation3], 128, 128, 8
    $region9: #{gpt_predictor_forward.1} parent=1 // pred_fallthru
      _
    // Predicated region
    $region10: #{gpt_predictor_forward.1} parent=1 // pred_check
      _
    $region11: #{gpt_predictor_forward.1} parent=1 // pred_check_branch
      %23 = sbr.rel (0) target = $region13
    $region12: #{gpt_predictor_forward.1} parent=1 // pred_region
      %24 = dma.done [#allocation3], 3200
    $region13: #{gpt_predictor_forward.1} parent=1 // pred_fallthru
      _
    %v25 = vld [vmem:[%s0] sm:$0xff]
    %v26 = vld [vmem:[%s0 + $0x8] sm:$0xff]
    %v27 = vld [vmem:[%s0 + $0x10] sm:$0xff]
    %v28 = vld [vmem:[%s0 + $0x18] sm:$0xff]
    %v29 = vld [vmem:[%s0 + $0x20] sm:$0xff]
    %v30 = vld [vmem:[%s0 + $0x28] sm:$0xff]
    %v31 = vld [vmem:[%s0 + $0x30] sm:$0xff]
    %v32 = vld [vmem:[%s0 + $0x38] sm:$0xff]
    %v33 = vlaneseq
    %v34 = vand.u32 %v33, 127
    %35 = vset.pattern.permute.xlu0 0
    %36 = vperm.xlu0 %35, %v25
    %v37 = vpop.permute.xlu0 %36
    %38 = vset.pattern.permute.xlu0 0
    %39 = vperm.xlu0 %38, %v26
    %v40 = vpop.permute.xlu0 %39
    %41 = vset.pattern.permute.xlu0 0
    %42 = vperm.xlu0 %41, %v27
    %v43 = vpop.permute.xlu0 %42
    %44 = vset.pattern.permute.xlu0 0
    %45 = vperm.xlu0 %44, %v28
    %v46 = vpop.permute.xlu0 %45
    %47 = vset.pattern.permute.xlu0 0
    %48 = vperm.xlu0 %47, %v29
    %v49 = vpop.permute.xlu0 %48
    %50 = vset.pattern.permute.xlu0 0
    %51 = vperm.xlu0 %50, %v30
    %v52 = vpop.permute.xlu0 %51
    %53 = vset.pattern.permute.xlu0 0
    %54 = vperm.xlu0 %53, %v31
    %v55 = vpop.permute.xlu0 %54
    %56 = vset.pattern.permute.xlu0 0
    %57 = vperm.xlu0 %56, %v32
    %v58 = vpop.permute.xlu0 %57
    %vm59 = vcmp.eq.s32.totalorder %v37, %v34
    %vm60 = vcmp.eq.s32.totalorder %v40, %v34
    %vm61 = vcmp.eq.s32.totalorder %v43, %v34
    %vm62 = vcmp.eq.s32.totalorder %v46, %v34
    %vm63 = vcmp.eq.s32.totalorder %v49, %v34
    %vm64 = vcmp.eq.s32.totalorder %v52, %v34
    %vm65 = vcmp.eq.s32.totalorder %v55, %v34
    %vm66 = vcmp.eq.s32.totalorder %v58, %v34
    %v67 = vsel %vm59, 1, 0
    %v68 = vsel %vm60, 1, 0
    %v69 = vsel %vm61, 1, 0
    %v70 = vsel %vm62, 1, 0
    %v71 = vsel %vm63, 1, 0
    %v72 = vsel %vm64, 1, 0
    %v73 = vsel %vm65, 1, 0
    %v74 = vsel %vm66, 1, 0
    %v75 = vcvt.s32.f32 %v67
    %v76 = vcvt.s32.f32 %v68
    %v77 = vcvt.s32.f32 %v69
    %v78 = vcvt.s32.f32 %v70
    %v79 = vcvt.s32.f32 %v71
    %v80 = vcvt.s32.f32 %v72
    %v81 = vcvt.s32.f32 %v73
    %v82 = vcvt.s32.f32 %v74
    %v83 = vld [vmem:[#allocation2] sm:$0xff]
    %v84 = vld [vmem:[#allocation2 + $0x8] sm:$0xff]
    %vm85 = vcmask 130048
    %v87 = vsel %vm85, %v75, 0
    %v90 = vsel %vm85, %v76, 0
    %v93 = vsel %vm85, %v77, 0
    %v96 = vsel %vm85, %v78, 0
    %v99 = vsel %vm85, %v79, 0
    %v102 = vsel %vm85, %v80, 0
    %v105 = vsel %vm85, %v81, 0
    %v108 = vsel %vm85, %v82, 0
    %110 = vmatprep.subr.mxu0 0.0
    %111 = vmatpush1.msra.mxu0 0.0
    %112 = vmatprep.subr.mxu0 0.0
    %113 = vmatpush1.msra.mxu0 0.0
    %114 = vmatprep.subr.mxu0 0.0
    %115 = vmatpush1.msra.mxu0 0.0
    %116 = vmatprep.subr.mxu0 0.0
    %117 = vmatpush1.msra.mxu0 0.0
    %118 = vmatprep.subr.mxu0 0.0
    %119 = vmatpush1.msra.mxu0 0.0
    %120 = vmatprep.subr.mxu0 0.0
    %121 = vmatpush1.msra.mxu0 0.0
    %122 = vmatprep.subr.mxu0 0.0
    %123 = vmatpush1.msra.mxu0 0.0
    %124 = vmatprep.subr.mxu0 0.0
    %125 = vmatpush1.msra.mxu0 0.0
    %126 = vmatprep.subr.mxu0 0.0
    %127 = vmatpush1.msra.mxu0 0.0
    %128 = vmatprep.subr.mxu0 0.0
    %129 = vmatpush1.msra.mxu0 0.0
    %130 = vmatprep.subr.mxu0 0.0
    %131 = vmatpush1.msra.mxu0 0.0
    %132 = vmatprep.subr.mxu0 0.0
    %133 = vmatpush1.msra.mxu0 0.0
    %134 = vmatprep.subr.mxu0 0.0
    %135 = vmatpush1.msra.mxu0 0.0
    %136 = vmatprep.subr.mxu0 0.0
    %137 = vmatpush1.msra.mxu0 0.0
    %138 = vmatprep.subr.mxu0 0.0
    %139 = vmatpush1.msra.mxu0 %v84
    %140 = vmatprep.subr.mxu0 0.0
    %141 = vmatpush1.msra.mxu0 %v83
    %142 = vmatprep.subr.mxu0 0.0
    %143 = vmatpush2.msra.mxu0 0.0
    %144 = vmatprep.subr.mxu0 0.0
    %145 = vmatpush2.msra.mxu0 0.0
    %146 = vmatprep.subr.mxu0 0.0
    %147 = vmatpush2.msra.mxu0 0.0
    %148 = vmatprep.subr.mxu0 0.0
    %149 = vmatpush2.msra.mxu0 0.0
    %150 = vmatprep.subr.mxu0 0.0
    %151 = vmatpush2.msra.mxu0 0.0
    %152 = vmatprep.subr.mxu0 0.0
    %153 = vmatpush2.msra.mxu0 0.0
    %154 = vmatprep.subr.mxu0 0.0
    %155 = vmatpush2.msra.mxu0 0.0
    %156 = vmatprep.subr.mxu0 0.0
    %157 = vmatpush2.msra.mxu0 0.0
    %158 = vmatprep.subr.mxu0 0.0
    %159 = vmatpush2.msra.mxu0 0.0
    %160 = vmatprep.subr.mxu0 0.0
    %161 = vmatpush2.msra.mxu0 0.0
    %162 = vmatprep.subr.mxu0 0.0
    %163 = vmatpush2.msra.mxu0 0.0
    %164 = vmatprep.subr.mxu0 0.0
    %165 = vmatpush2.msra.mxu0 0.0
    %166 = vmatprep.subr.mxu0 0.0
    %167 = vmatpush2.msra.mxu0 0.0
    %168 = vmatprep.subr.mxu0 0.0
    %169 = vmatpush2.msra.mxu0 0.0
    %170 = vmatprep.subr.mxu0 0.0
    %171 = vmatpush2.msra.mxu0 0.0
    %172 = vmatprep.subr.mxu0 0.0
    %173 = vmatpush2.msra.mxu0 0.0
    %174 = vmatprep.mubr.f32.mxu0 0.0
    %175 = vmatmul.mubr.f32.gmra.mxu0 %v87
    %v176 = vpop.f32.mrf.mxu0
    %v177 = vadd.f32 0.0, %v176
    %v178 = vpop.f32.mrf.mxu0
    %179 = vmatprep.mubr.f32.mxu0 0.0
    %180 = vmatmul.mubr.f32.gmra.mxu0 %v90
    %v181 = vpop.f32.mrf.mxu0
    %v182 = vadd.f32 0.0, %v181
    %v183 = vpop.f32.mrf.mxu0
    %184 = vmatprep.mubr.f32.mxu0 0.0
    %185 = vmatmul.mubr.f32.gmra.mxu0 %v93
    %v186 = vpop.f32.mrf.mxu0
    %v187 = vadd.f32 0.0, %v186
    %v188 = vpop.f32.mrf.mxu0
    %189 = vmatprep.mubr.f32.mxu0 0.0
    %190 = vmatmul.mubr.f32.gmra.mxu0 %v96
    %v191 = vpop.f32.mrf.mxu0
    %v192 = vadd.f32 0.0, %v191
    %v193 = vpop.f32.mrf.mxu0
    %194 = vmatprep.mubr.f32.mxu0 0.0
    %195 = vmatmul.mubr.f32.gmra.mxu0 %v99
    %v196 = vpop.f32.mrf.mxu0
    %v197 = vadd.f32 0.0, %v196
    %v198 = vpop.f32.mrf.mxu0
    %199 = vmatprep.mubr.f32.mxu0 0.0
    %200 = vmatmul.mubr.f32.gmra.mxu0 %v102
    %v201 = vpop.f32.mrf.mxu0
    %v202 = vadd.f32 0.0, %v201
    %v203 = vpop.f32.mrf.mxu0
    %204 = vmatprep.mubr.f32.mxu0 0.0
    %205 = vmatmul.mubr.f32.gmra.mxu0 %v105
    %v206 = vpop.f32.mrf.mxu0
    %v207 = vadd.f32 0.0, %v206
    %v208 = vpop.f32.mrf.mxu0
    %209 = vmatprep.mubr.f32.mxu0 0.0
    %210 = vmatmul.mubr.f32.gmra.mxu0 %v108
    %v211 = vpop.f32.mrf.mxu0
    %v212 = vadd.f32 0.0, %v211
    %v213 = vpop.f32.mrf.mxu0
    %214 = vdwg.mxu0
    %v215 = vld [vmem:[#allocation2 + $0xa8] sm:$0xff]
    %v216 = vadd.f32 %v177, %v215
    %v217 = vadd.f32 %v182, %v215
    %v218 = vadd.f32 %v187, %v215
    %v219 = vadd.f32 %v192, %v215
    %v220 = vadd.f32 %v197, %v215
    %v221 = vadd.f32 %v202, %v215
    %v222 = vadd.f32 %v207, %v215
    %v223 = vadd.f32 %v212, %v215
    %v224 = vld [vmem:[#allocation2 + $0xa0] sm:$0xff]
    %vm225 = vcmask 523264
    %v227 = vsel %vm225, %v224, 0
    %229 = vmatprep.subr.mxu0 0.0
    %230 = vmatpush1.msra.mxu0 0.0
    %231 = vmatprep.subr.mxu0 0.0
    %232 = vmatpush1.msra.mxu0 0.0
    %233 = vmatprep.subr.mxu0 0.0
    %234 = vmatpush1.msra.mxu0 0.0
    %235 = vmatprep.subr.mxu0 0.0
    %236 = vmatpush1.msra.mxu0 0.0
    %237 = vmatprep.subr.mxu0 0.0
    %238 = vmatpush1.msra.mxu0 0.0
    %239 = vmatprep.subr.mxu0 0.0
    %240 = vmatpush1.msra.mxu0 0.0
    %241 = vmatprep.subr.mxu0 0.0
    %242 = vmatpush1.msra.mxu0 0.0
    %243 = vmatprep.subr.mxu0 0.0
    %244 = vmatpush1.msra.mxu0 0.0
    %245 = vmatprep.subr.mxu0 0.0
    %246 = vmatpush1.msra.mxu0 %v223
    %247 = vmatprep.subr.mxu0 0.0
    %248 = vmatpush1.msra.mxu0 %v222
    %249 = vmatprep.subr.mxu0 0.0
    %250 = vmatpush1.msra.mxu0 %v221
    %251 = vmatprep.subr.mxu0 0.0
    %252 = vmatpush1.msra.mxu0 %v220
    %253 = vmatprep.subr.mxu0 0.0
    %254 = vmatpush1.msra.mxu0 %v219
    %255 = vmatprep.subr.mxu0 0.0
    %256 = vmatpush1.msra.mxu0 %v218
    %257 = vmatprep.subr.mxu0 0.0
    %258 = vmatpush1.msra.mxu0 %v217
    %259 = vmatprep.subr.mxu0 0.0
    %260 = vmatpush1.msra.mxu0 %v216
    %261 = vmatprep.subr.mxu0 0.0
    %262 = vmatpush2.msra.mxu0 0.0
    %263 = vmatprep.subr.mxu0 0.0
    %264 = vmatpush2.msra.mxu0 0.0
    %265 = vmatprep.subr.mxu0 0.0
    %266 = vmatpush2.msra.mxu0 0.0
    %267 = vmatprep.subr.mxu0 0.0
    %268 = vmatpush2.msra.mxu0 0.0
    %269 = vmatprep.subr.mxu0 0.0
    %270 = vmatpush2.msra.mxu0 0.0
    %271 = vmatprep.subr.mxu0 0.0
    %272 = vmatpush2.msra.mxu0 0.0
    %273 = vmatprep.subr.mxu0 0.0
    %274 = vmatpush2.msra.mxu0 0.0
    %275 = vmatprep.subr.mxu0 0.0
    %276 = vmatpush2.msra.mxu0 0.0
    %277 = vmatprep.subr.mxu0 0.0
    %278 = vmatpush2.msra.mxu0 0.0
    %279 = vmatprep.subr.mxu0 0.0
    %280 = vmatpush2.msra.mxu0 0.0
    %281 = vmatprep.subr.mxu0 0.0
    %282 = vmatpush2.msra.mxu0 0.0
    %283 = vmatprep.subr.mxu0 0.0
    %284 = vmatpush2.msra.mxu0 0.0
    %285 = vmatprep.subr.mxu0 0.0
    %286 = vmatpush2.msra.mxu0 0.0
    %287 = vmatprep.subr.mxu0 0.0
    %288 = vmatpush2.msra.mxu0 0.0
    %289 = vmatprep.subr.mxu0 0.0
    %290 = vmatpush2.msra.mxu0 0.0
    %291 = vmatprep.subr.mxu0 0.0
    %292 = vmatpush2.msra.mxu0 0.0
    %293 = vmatprep.mubr.f32.mxu0 0.0
    %294 = vmatmul.mubr.f32.gmra.mxu0 %v227
    %v295 = vpop.f32.mrf.mxu0
    %v296 = vadd.f32 0.0, %v295
    %v297 = vpop.f32.mrf.mxu0
    %298 = vdwg.mxu0
    %v299 = vld [vmem:[#allocation2 + $0x10] sm:$0xff]
    %v300 = vld [vmem:[#allocation2 + $0x18] sm:$0xff]
    %v301 = vld [vmem:[#allocation2 + $0xb8] sm:$0x1]
    %v302 = vlaneseq
    %v303 = vshrl.u32 %v302, 7
    %v304 = vsub.s32 0, %v303
    %v305 = vrot.slane %v301, %v304
    %v307 = vsel %vm85, %v296, 0
    %309 = vmatprep.subr.mxu0 0.0
    %310 = vmatpush1.msra.mxu0 0.0
    %311 = vmatprep.subr.mxu0 0.0
    %312 = vmatpush1.msra.mxu0 0.0
    %313 = vmatprep.subr.mxu0 0.0
    %314 = vmatpush1.msra.mxu0 0.0
    %315 = vmatprep.subr.mxu0 0.0
    %316 = vmatpush1.msra.mxu0 0.0
    %317 = vmatprep.subr.mxu0 0.0
    %318 = vmatpush1.msra.mxu0 0.0
    %319 = vmatprep.subr.mxu0 0.0
    %320 = vmatpush1.msra.mxu0 0.0
    %321 = vmatprep.subr.mxu0 0.0
    %322 = vmatpush1.msra.mxu0 0.0
    %323 = vmatprep.subr.mxu0 0.0
    %324 = vmatpush1.msra.mxu0 0.0
    %325 = vmatprep.subr.mxu0 0.0
    %326 = vmatpush1.msra.mxu0 0.0
    %327 = vmatprep.subr.mxu0 0.0
    %328 = vmatpush1.msra.mxu0 0.0
    %329 = vmatprep.subr.mxu0 0.0
    %330 = vmatpush1.msra.mxu0 0.0
    %331 = vmatprep.subr.mxu0 0.0
    %332 = vmatpush1.msra.mxu0 0.0
    %333 = vmatprep.subr.mxu0 0.0
    %334 = vmatpush1.msra.mxu0 0.0
    %335 = vmatprep.subr.mxu0 0.0
    %336 = vmatpush1.msra.mxu0 0.0
    %337 = vmatprep.subr.mxu0 0.0
    %338 = vmatpush1.msra.mxu0 %v300
    %339 = vmatprep.subr.mxu0 0.0
    %340 = vmatpush1.msra.mxu0 %v299
    %341 = vmatprep.subr.mxu0 0.0
    %342 = vmatpush2.msra.mxu0 0.0
    %343 = vmatprep.subr.mxu0 0.0
    %344 = vmatpush2.msra.mxu0 0.0
    %345 = vmatprep.subr.mxu0 0.0
    %346 = vmatpush2.msra.mxu0 0.0
    %347 = vmatprep.subr.mxu0 0.0
    %348 = vmatpush2.msra.mxu0 0.0
    %349 = vmatprep.subr.mxu0 0.0
    %350 = vmatpush2.msra.mxu0 0.0
    %351 = vmatprep.subr.mxu0 0.0
    %352 = vmatpush2.msra.mxu0 0.0
    %353 = vmatprep.subr.mxu0 0.0
    %354 = vmatpush2.msra.mxu0 0.0
    %355 = vmatprep.subr.mxu0 0.0
    %356 = vmatpush2.msra.mxu0 0.0
    %357 = vmatprep.subr.mxu0 0.0
    %358 = vmatpush2.msra.mxu0 0.0
    %359 = vmatprep.subr.mxu0 0.0
    %360 = vmatpush2.msra.mxu0 0.0
    %361 = vmatprep.subr.mxu0 0.0
    %362 = vmatpush2.msra.mxu0 0.0
    %363 = vmatprep.subr.mxu0 0.0
    %364 = vmatpush2.msra.mxu0 0.0
    %365 = vmatprep.subr.mxu0 0.0
    %366 = vmatpush2.msra.mxu0 0.0
    %367 = vmatprep.subr.mxu0 0.0
    %368 = vmatpush2.msra.mxu0 0.0
    %369 = vmatprep.subr.mxu0 0.0
    %370 = vmatpush2.msra.mxu0 0.0
    %371 = vmatprep.subr.mxu0 0.0
    %372 = vmatpush2.msra.mxu0 0.0
    %373 = vmatprep.mubr.f32.mxu0 0.0
    %374 = vmatmul.mubr.f32.gmra.mxu0 %v307
    %v375 = vpop.f32.mrf.mxu0
    %v376 = vadd.f32 %v305, %v375
    %v377 = vpop.f32.mrf.mxu0
    %378 = vdwg.mxu0
    %v379 = vadd.f32 %v296, %v376
    %v380 = vld [vmem:[#allocation2 + $0xbd] sm:$0x1]
    %v381 = vld [vmem:[#allocation2 + $0xbe] sm:$0x1]
    %v382 = vsel %vm85, %v379, 0.0
    %383 = vadd.xlane.f32.xlu0 %v382
    %v384 = vpop.xlane.xlu0 %383
    %v385 = vrcp.pop 16.0
    %v386 = vmul.f32 %v384, %v385
    %v387 = vsub.f32 %v379, %v386
    %v388 = vmul.f32 %v387, %v387
    %v389 = vsel %vm85, %v388, 0.0
    %390 = vadd.xlane.f32.xlu0 %v389
    %v391 = vpop.xlane.xlu0 %390
    %v392 = vmul.f32 %v391, %v385
    %v393 = vadd.f32 %v392, 1e-05
    %v394 = vrsqrt.pop %v393
    %v395 = vmul.f32 %v387, %v394
    %v396 = vlaneseq
    %v397 = vshrl.u32 %v396, 7
    %v398 = vsub.s32 0, %v397
    %v399 = vrot.slane %v380, %v398
    %v400 = vmul.f32 %v395, %v399
    %v401 = vlaneseq
    %v402 = vshrl.u32 %v401, 7
    %v403 = vsub.s32 0, %v402
    %v404 = vrot.slane %v381, %v403
    %v405 = vadd.f32 %v400, %v404
    %v406 = vld [vmem:[#allocation2 + $0x20] sm:$0xff]
    %v407 = vld [vmem:[#allocation2 + $0x28] sm:$0xff]
    %v408 = vld [vmem:[#allocation2 + $0xb9] sm:$0x1]
    %v409 = vlaneseq
    %v410 = vshrl.u32 %v409, 7
    %v411 = vsub.s32 0, %v410
    %v412 = vrot.slane %v408, %v411
    %v414 = vsel %vm85, %v405, 0
    %416 = vmatprep.subr.mxu0 0.0
    %417 = vmatpush1.msra.mxu0 0.0
    %418 = vmatprep.subr.mxu0 0.0
    %419 = vmatpush1.msra.mxu0 0.0
    %420 = vmatprep.subr.mxu0 0.0
    %421 = vmatpush1.msra.mxu0 0.0
    %422 = vmatprep.subr.mxu0 0.0
    %423 = vmatpush1.msra.mxu0 0.0
    %424 = vmatprep.subr.mxu0 0.0
    %425 = vmatpush1.msra.mxu0 0.0
    %426 = vmatprep.subr.mxu0 0.0
    %427 = vmatpush1.msra.mxu0 0.0
    %428 = vmatprep.subr.mxu0 0.0
    %429 = vmatpush1.msra.mxu0 0.0
    %430 = vmatprep.subr.mxu0 0.0
    %431 = vmatpush1.msra.mxu0 0.0
    %432 = vmatprep.subr.mxu0 0.0
    %433 = vmatpush1.msra.mxu0 0.0
    %434 = vmatprep.subr.mxu0 0.0
    %435 = vmatpush1.msra.mxu0 0.0
    %436 = vmatprep.subr.mxu0 0.0
    %437 = vmatpush1.msra.mxu0 0.0
    %438 = vmatprep.subr.mxu0 0.0
    %439 = vmatpush1.msra.mxu0 0.0
    %440 = vmatprep.subr.mxu0 0.0
    %441 = vmatpush1.msra.mxu0 0.0
    %442 = vmatprep.subr.mxu0 0.0
    %443 = vmatpush1.msra.mxu0 0.0
    %444 = vmatprep.subr.mxu0 0.0
    %445 = vmatpush1.msra.mxu0 %v407
    %446 = vmatprep.subr.mxu0 0.0
    %447 = vmatpush1.msra.mxu0 %v406
    %448 = vmatprep.subr.mxu0 0.0
    %449 = vmatpush2.msra.mxu0 0.0
    %450 = vmatprep.subr.mxu0 0.0
    %451 = vmatpush2.msra.mxu0 0.0
    %452 = vmatprep.subr.mxu0 0.0
    %453 = vmatpush2.msra.mxu0 0.0
    %454 = vmatprep.subr.mxu0 0.0
    %455 = vmatpush2.msra.mxu0 0.0
    %456 = vmatprep.subr.mxu0 0.0
    %457 = vmatpush2.msra.mxu0 0.0
    %458 = vmatprep.subr.mxu0 0.0
    %459 = vmatpush2.msra.mxu0 0.0
    %460 = vmatprep.subr.mxu0 0.0
    %461 = vmatpush2.msra.mxu0 0.0
    %462 = vmatprep.subr.mxu0 0.0
    %463 = vmatpush2.msra.mxu0 0.0
    %464 = vmatprep.subr.mxu0 0.0
    %465 = vmatpush2.msra.mxu0 0.0
    %466 = vmatprep.subr.mxu0 0.0
    %467 = vmatpush2.msra.mxu0 0.0
    %468 = vmatprep.subr.mxu0 0.0
    %469 = vmatpush2.msra.mxu0 0.0
    %470 = vmatprep.subr.mxu0 0.0
    %471 = vmatpush2.msra.mxu0 0.0
    %472 = vmatprep.subr.mxu0 0.0
    %473 = vmatpush2.msra.mxu0 0.0
    %474 = vmatprep.subr.mxu0 0.0
    %475 = vmatpush2.msra.mxu0 0.0
    %476 = vmatprep.subr.mxu0 0.0
    %477 = vmatpush2.msra.mxu0 0.0
    %478 = vmatprep.subr.mxu0 0.0
    %479 = vmatpush2.msra.mxu0 0.0
    %480 = vmatprep.mubr.f32.mxu0 0.0
    %481 = vmatmul.mubr.f32.gmra.mxu0 %v414
    %v482 = vpop.f32.mrf.mxu0
    %v483 = vadd.f32 %v412, %v482
    %v484 = vpop.f32.mrf.mxu0
    %485 = vdwg.mxu0
    %v486 = vld [vmem:[#allocation2 + $0x30] sm:$0xff]
    %v487 = vld [vmem:[#allocation2 + $0x38] sm:$0xff]
    %v488 = vld [vmem:[#allocation2 + $0xba] sm:$0x1]
    %v489 = vlaneseq
    %v490 = vshrl.u32 %v489, 7
    %v491 = vsub.s32 0, %v490
    %v492 = vrot.slane %v488, %v491
    %v494 = vsel %vm85, %v216, 0
    %v497 = vsel %vm85, %v217, 0
    %v500 = vsel %vm85, %v218, 0
    %v503 = vsel %vm85, %v219, 0
    %v506 = vsel %vm85, %v220, 0
    %v509 = vsel %vm85, %v221, 0
    %v512 = vsel %vm85, %v222, 0
    %v515 = vsel %vm85, %v223, 0
    %517 = vmatprep.subr.mxu0 0.0
    %518 = vmatpush1.msra.mxu0 0.0
    %519 = vmatprep.subr.mxu0 0.0
    %520 = vmatpush1.msra.mxu0 0.0
    %521 = vmatprep.subr.mxu0 0.0
    %522 = vmatpush1.msra.mxu0 0.0
    %523 = vmatprep.subr.mxu0 0.0
    %524 = vmatpush1.msra.mxu0 0.0
    %525 = vmatprep.subr.mxu0 0.0
    %526 = vmatpush1.msra.mxu0 0.0
    %527 = vmatprep.subr.mxu0 0.0
    %528 = vmatpush1.msra.mxu0 0.0
    %529 = vmatprep.subr.mxu0 0.0
    %530 = vmatpush1.msra.mxu0 0.0
    %531 = vmatprep.subr.mxu0 0.0
    %532 = vmatpush1.msra.mxu0 0.0
    %533 = vmatprep.subr.mxu0 0.0
    %534 = vmatpush1.msra.mxu0 0.0
    %535 = vmatprep.subr.mxu0 0.0
    %536 = vmatpush1.msra.mxu0 0.0
    %537 = vmatprep.subr.mxu0 0.0
    %538 = vmatpush1.msra.mxu0 0.0
    %539 = vmatprep.subr.mxu0 0.0
    %540 = vmatpush1.msra.mxu0 0.0
    %541 = vmatprep.subr.mxu0 0.0
    %542 = vmatpush1.msra.mxu0 0.0
    %543 = vmatprep.subr.mxu0 0.0
    %544 = vmatpush1.msra.mxu0 0.0
    %545 = vmatprep.subr.mxu0 0.0
    %546 = vmatpush1.msra.mxu0 %v487
    %547 = vmatprep.subr.mxu0 0.0
    %548 = vmatpush1.msra.mxu0 %v486
    %549 = vmatprep.subr.mxu0 0.0
    %550 = vmatpush2.msra.mxu0 0.0
    %551 = vmatprep.subr.mxu0 0.0
    %552 = vmatpush2.msra.mxu0 0.0
    %553 = vmatprep.subr.mxu0 0.0
    %554 = vmatpush2.msra.mxu0 0.0
    %555 = vmatprep.subr.mxu0 0.0
    %556 = vmatpush2.msra.mxu0 0.0
    %557 = vmatprep.subr.mxu0 0.0
    %558 = vmatpush2.msra.mxu0 0.0
    %559 = vmatprep.subr.mxu0 0.0
    %560 = vmatpush2.msra.mxu0 0.0
    %561 = vmatprep.subr.mxu0 0.0
    %562 = vmatpush2.msra.mxu0 0.0
    %563 = vmatprep.subr.mxu0 0.0
    %564 = vmatpush2.msra.mxu0 0.0
    %565 = vmatprep.subr.mxu0 0.0
    %566 = vmatpush2.msra.mxu0 0.0
    %567 = vmatprep.subr.mxu0 0.0
    %568 = vmatpush2.msra.mxu0 0.0
    %569 = vmatprep.subr.mxu0 0.0
    %570 = vmatpush2.msra.mxu0 0.0
    %571 = vmatprep.subr.mxu0 0.0
    %572 = vmatpush2.msra.mxu0 0.0
    %573 = vmatprep.subr.mxu0 0.0
    %574 = vmatpush2.msra.mxu0 0.0
    %575 = vmatprep.subr.mxu0 0.0
    %576 = vmatpush2.msra.mxu0 0.0
    %577 = vmatprep.subr.mxu0 0.0
    %578 = vmatpush2.msra.mxu0 0.0
    %579 = vmatprep.subr.mxu0 0.0
    %580 = vmatpush2.msra.mxu0 0.0
    %581 = vmatprep.mubr.f32.mxu0 0.0
    %582 = vmatmul.mubr.f32.gmra.mxu0 %v494
    %v583 = vpop.f32.mrf.mxu0
    %v584 = vadd.f32 %v492, %v583
    %v585 = vpop.f32.mrf.mxu0
    %586 = vmatprep.mubr.f32.mxu0 0.0
    %587 = vmatmul.mubr.f32.gmra.mxu0 %v497
    %v588 = vpop.f32.mrf.mxu0
    %v589 = vadd.f32 %v492, %v588
    %v590 = vpop.f32.mrf.mxu0
    %591 = vmatprep.mubr.f32.mxu0 0.0
    %592 = vmatmul.mubr.f32.gmra.mxu0 %v500
    %v593 = vpop.f32.mrf.mxu0
    %v594 = vadd.f32 %v492, %v593
    %v595 = vpop.f32.mrf.mxu0
    %596 = vmatprep.mubr.f32.mxu0 0.0
    %597 = vmatmul.mubr.f32.gmra.mxu0 %v503
    %v598 = vpop.f32.mrf.mxu0
    %v599 = vadd.f32 %v492, %v598
    %v600 = vpop.f32.mrf.mxu0
    %601 = vmatprep.mubr.f32.mxu0 0.0
    %602 = vmatmul.mubr.f32.gmra.mxu0 %v506
    %v603 = vpop.f32.mrf.mxu0
    %v604 = vadd.f32 %v492, %v603
    %v605 = vpop.f32.mrf.mxu0
    %606 = vmatprep.mubr.f32.mxu0 0.0
    %607 = vmatmul.mubr.f32.gmra.mxu0 %v509
    %v608 = vpop.f32.mrf.mxu0
    %v609 = vadd.f32 %v492, %v608
    %v610 = vpop.f32.mrf.mxu0
    %611 = vmatprep.mubr.f32.mxu0 0.0
    %612 = vmatmul.mubr.f32.gmra.mxu0 %v512
    %v613 = vpop.f32.mrf.mxu0
    %v614 = vadd.f32 %v492, %v613
    %v615 = vpop.f32.mrf.mxu0
    %616 = vmatprep.mubr.f32.mxu0 0.0
    %617 = vmatmul.mubr.f32.gmra.mxu0 %v515
    %v618 = vpop.f32.mrf.mxu0
    %v619 = vadd.f32 %v492, %v618
    %v620 = vpop.f32.mrf.mxu0
    %621 = vdwg.mxu0
    %v622 = vld [vmem:[#allocation2 + $0x40] sm:$0xff]
    %v623 = vld [vmem:[#allocation2 + $0x48] sm:$0xff]
    %v624 = vld [vmem:[#allocation2 + $0xbb] sm:$0x1]
    %v625 = vlaneseq
    %v626 = vshrl.u32 %v625, 7
    %v627 = vsub.s32 0, %v626
    %v628 = vrot.slane %v624, %v627
    %629 = vmatprep.subr.mxu0 0.0
    %630 = vmatpush1.msra.mxu0 0.0
    %631 = vmatprep.subr.mxu0 0.0
    %632 = vmatpush1.msra.mxu0 0.0
    %633 = vmatprep.subr.mxu0 0.0
    %634 = vmatpush1.msra.mxu0 0.0
    %635 = vmatprep.subr.mxu0 0.0
    %636 = vmatpush1.msra.mxu0 0.0
    %637 = vmatprep.subr.mxu0 0.0
    %638 = vmatpush1.msra.mxu0 0.0
    %639 = vmatprep.subr.mxu0 0.0
    %640 = vmatpush1.msra.mxu0 0.0
    %641 = vmatprep.subr.mxu0 0.0
    %642 = vmatpush1.msra.mxu0 0.0
    %643 = vmatprep.subr.mxu0 0.0
    %644 = vmatpush1.msra.mxu0 0.0
    %645 = vmatprep.subr.mxu0 0.0
    %646 = vmatpush1.msra.mxu0 0.0
    %647 = vmatprep.subr.mxu0 0.0
    %648 = vmatpush1.msra.mxu0 0.0
    %649 = vmatprep.subr.mxu0 0.0
    %650 = vmatpush1.msra.mxu0 0.0
    %651 = vmatprep.subr.mxu0 0.0
    %652 = vmatpush1.msra.mxu0 0.0
    %653 = vmatprep.subr.mxu0 0.0
    %654 = vmatpush1.msra.mxu0 0.0
    %655 = vmatprep.subr.mxu0 0.0
    %656 = vmatpush1.msra.mxu0 0.0
    %657 = vmatprep.subr.mxu0 0.0
    %658 = vmatpush1.msra.mxu0 %v623
    %659 = vmatprep.subr.mxu0 0.0
    %660 = vmatpush1.msra.mxu0 %v622
    %661 = vmatprep.subr.mxu0 0.0
    %662 = vmatpush2.msra.mxu0 0.0
    %663 = vmatprep.subr.mxu0 0.0
    %664 = vmatpush2.msra.mxu0 0.0
    %665 = vmatprep.subr.mxu0 0.0
    %666 = vmatpush2.msra.mxu0 0.0
    %667 = vmatprep.subr.mxu0 0.0
    %668 = vmatpush2.msra.mxu0 0.0
    %669 = vmatprep.subr.mxu0 0.0
    %670 = vmatpush2.msra.mxu0 0.0
    %671 = vmatprep.subr.mxu0 0.0
    %672 = vmatpush2.msra.mxu0 0.0
    %673 = vmatprep.subr.mxu0 0.0
    %674 = vmatpush2.msra.mxu0 0.0
    %675 = vmatprep.subr.mxu0 0.0
    %676 = vmatpush2.msra.mxu0 0.0
    %677 = vmatprep.subr.mxu0 0.0
    %678 = vmatpush2.msra.mxu0 0.0
    %679 = vmatprep.subr.mxu0 0.0
    %680 = vmatpush2.msra.mxu0 0.0
    %681 = vmatprep.subr.mxu0 0.0
    %682 = vmatpush2.msra.mxu0 0.0
    %683 = vmatprep.subr.mxu0 0.0
    %684 = vmatpush2.msra.mxu0 0.0
    %685 = vmatprep.subr.mxu0 0.0
    %686 = vmatpush2.msra.mxu0 0.0
    %687 = vmatprep.subr.mxu0 0.0
    %688 = vmatpush2.msra.mxu0 0.0
    %689 = vmatprep.subr.mxu0 0.0
    %690 = vmatpush2.msra.mxu0 0.0
    %691 = vmatprep.subr.mxu0 0.0
    %692 = vmatpush2.msra.mxu0 0.0
    %693 = vmatprep.mubr.f32.mxu0 0.0
    %694 = vmatmul.mubr.f32.gmra.mxu0 %v494
    %v695 = vpop.f32.mrf.mxu0
    %v696 = vadd.f32 %v628, %v695
    %v697 = vpop.f32.mrf.mxu0
    %698 = vmatprep.mubr.f32.mxu0 0.0
    %699 = vmatmul.mubr.f32.gmra.mxu0 %v497
    %v700 = vpop.f32.mrf.mxu0
    %v701 = vadd.f32 %v628, %v700
    %v702 = vpop.f32.mrf.mxu0
    %703 = vmatprep.mubr.f32.mxu0 0.0
    %704 = vmatmul.mubr.f32.gmra.mxu0 %v500
    %v705 = vpop.f32.mrf.mxu0
    %v706 = vadd.f32 %v628, %v705
    %v707 = vpop.f32.mrf.mxu0
    %708 = vmatprep.mubr.f32.mxu0 0.0
    %709 = vmatmul.mubr.f32.gmra.mxu0 %v503
    %v710 = vpop.f32.mrf.mxu0
    %v711 = vadd.f32 %v628, %v710
    %v712 = vpop.f32.mrf.mxu0
    %713 = vmatprep.mubr.f32.mxu0 0.0
    %714 = vmatmul.mubr.f32.gmra.mxu0 %v506
    %v715 = vpop.f32.mrf.mxu0
    %v716 = vadd.f32 %v628, %v715
    %v717 = vpop.f32.mrf.mxu0
    %718 = vmatprep.mubr.f32.mxu0 0.0
    %719 = vmatmul.mubr.f32.gmra.mxu0 %v509
    %v720 = vpop.f32.mrf.mxu0
    %v721 = vadd.f32 %v628, %v720
    %v722 = vpop.f32.mrf.mxu0
    %723 = vmatprep.mubr.f32.mxu0 0.0
    %724 = vmatmul.mubr.f32.gmra.mxu0 %v512
    %v725 = vpop.f32.mrf.mxu0
    %v726 = vadd.f32 %v628, %v725
    %v727 = vpop.f32.mrf.mxu0
    %728 = vmatprep.mubr.f32.mxu0 0.0
    %729 = vmatmul.mubr.f32.gmra.mxu0 %v515
    %v730 = vpop.f32.mrf.mxu0
    %v731 = vadd.f32 %v628, %v730
    %v732 = vpop.f32.mrf.mxu0
    %733 = vdwg.mxu0
    %v735 = vcombine.high %v483, %v483
    %v737 = vunpack.c.l.s4 1966171168
    %v738 = vunpack.c.0.s8 %v737
    %v739 = vlaneseq
    %v740 = vshrl.u32 %v739, 7
    %v741 = vsub.s32 %v738, %v740
    %v742 = vrot.slane %v483, %v741
    %v744 = vunpack.c.l.s4 1966171168
    %v745 = vunpack.c.0.s8 %v744
    %v746 = vlaneseq
    %v747 = vshrl.u32 %v746, 7
    %v748 = vsub.s32 %v745, %v747
    %v749 = vrot.slane %v735, %v748
    %v750 = vcombine.high %v742, %v742
    %v751 = vcombine.high %v749, %v749
    %v753 = vunpack.c.l.s4 1966171168
    %v754 = vunpack.c.0.s8 %v753
    %v755 = vlaneseq
    %v756 = vshrl.u32 %v755, 7
    %v757 = vsub.s32 %v754, %v756
    %v758 = vrot.slane %v742, %v757
    %v760 = vunpack.c.l.s4 1966171168
    %v761 = vunpack.c.0.s8 %v760
    %v762 = vlaneseq
    %v763 = vshrl.u32 %v762, 7
    %v764 = vsub.s32 %v761, %v763
    %v765 = vrot.slane %v749, %v764
    %v767 = vunpack.c.l.s4 1966171168
    %v768 = vunpack.c.0.s8 %v767
    %v769 = vlaneseq
    %v770 = vshrl.u32 %v769, 7
    %v771 = vsub.s32 %v768, %v770
    %v772 = vrot.slane %v750, %v771
    %v774 = vunpack.c.l.s4 1966171168
    %v775 = vunpack.c.0.s8 %v774
    %v776 = vlaneseq
    %v777 = vshrl.u32 %v776, 7
    %v778 = vsub.s32 %v775, %v777
    %v779 = vrot.slane %v751, %v778
    %v780 = vcombine.high %v758, %v758
    %v781 = vcombine.high %v765, %v765
    %v782 = vcombine.high %v772, %v772
    %v783 = vcombine.high %v779, %v779
    %v784 = vlaneseq
    %v785 = vshrl.u32 %v784, 7
    %v786 = vsub.s32 0, %v785
    %v787 = vrot.slane %v758, %v786
    %v788 = vlaneseq
    %v789 = vshrl.u32 %v788, 7
    %v790 = vsub.s32 0, %v789
    %v791 = vrot.slane %v772, %v790
    %v792 = vlaneseq
    %v793 = vshrl.u32 %v792, 7
    %v794 = vsub.s32 0, %v793
    %v795 = vrot.slane %v780, %v794
    %v796 = vlaneseq
    %v797 = vshrl.u32 %v796, 7
    %v798 = vsub.s32 0, %v797
    %v799 = vrot.slane %v782, %v798
    %v800 = vlaneseq
    %v801 = vshrl.u32 %v800, 7
    %v802 = vsub.s32 0, %v801
    %v803 = vrot.slane %v765, %v802
    %v804 = vlaneseq
    %v805 = vshrl.u32 %v804, 7
    %v806 = vsub.s32 0, %v805
    %v807 = vrot.slane %v779, %v806
    %v808 = vlaneseq
    %v809 = vshrl.u32 %v808, 7
    %v810 = vsub.s32 0, %v809
    %v811 = vrot.slane %v781, %v810
    %v812 = vlaneseq
    %v813 = vshrl.u32 %v812, 7
    %v814 = vsub.s32 0, %v813
    %v815 = vrot.slane %v783, %v814
    %v824 = vmul.f32 %v787, %v584
    %v825 = vmul.f32 %v791, %v589
    %v826 = vmul.f32 %v795, %v594
    %v827 = vmul.f32 %v799, %v599
    %v828 = vmul.f32 %v803, %v604
    %v829 = vmul.f32 %v807, %v609
    %v830 = vmul.f32 %v811, %v614
    %v831 = vmul.f32 %v815, %v619
    %v832 = vld [vmem:[#allocation2 + $0x90] sm:$0xff]
    %v833 = vld [vmem:[#allocation2 + $0x98] sm:$0xff]
    %v835 = vsel %vm85, %v824, 0
    %v838 = vsel %vm85, %v825, 0
    %v841 = vsel %vm85, %v826, 0
    %v844 = vsel %vm85, %v827, 0
    %v847 = vsel %vm85, %v828, 0
    %v850 = vsel %vm85, %v829, 0
    %v853 = vsel %vm85, %v830, 0
    %v856 = vsel %vm85, %v831, 0
    %858 = vmatprep.subr.mxu0 0.0
    %859 = vmatpush1.msra.mxu0 0.0
    %860 = vmatprep.subr.mxu0 0.0
    %861 = vmatpush1.msra.mxu0 0.0
    %862 = vmatprep.subr.mxu0 0.0
    %863 = vmatpush1.msra.mxu0 0.0
    %864 = vmatprep.subr.mxu0 0.0
    %865 = vmatpush1.msra.mxu0 0.0
    %866 = vmatprep.subr.mxu0 0.0
    %867 = vmatpush1.msra.mxu0 0.0
    %868 = vmatprep.subr.mxu0 0.0
    %869 = vmatpush1.msra.mxu0 0.0
    %870 = vmatprep.subr.mxu0 0.0
    %871 = vmatpush1.msra.mxu0 0.0
    %872 = vmatprep.subr.mxu0 0.0
    %873 = vmatpush1.msra.mxu0 0.0
    %874 = vmatprep.subr.mxu0 0.0
    %875 = vmatpush1.msra.mxu0 0.0
    %876 = vmatprep.subr.mxu0 0.0
    %877 = vmatpush1.msra.mxu0 0.0
    %878 = vmatprep.subr.mxu0 0.0
    %879 = vmatpush1.msra.mxu0 0.0
    %880 = vmatprep.subr.mxu0 0.0
    %881 = vmatpush1.msra.mxu0 0.0
    %882 = vmatprep.subr.mxu0 0.0
    %883 = vmatpush1.msra.mxu0 0.0
    %884 = vmatprep.subr.mxu0 0.0
    %885 = vmatpush1.msra.mxu0 0.0
    %886 = vmatprep.subr.mxu0 0.0
    %887 = vmatpush1.msra.mxu0 %v833
    %888 = vmatprep.subr.mxu0 0.0
    %889 = vmatpush1.msra.mxu0 %v832
    %890 = vmatprep.subr.mxu0 0.0
    %891 = vmatpush2.msra.mxu0 0.0
    %892 = vmatprep.subr.mxu0 0.0
    %893 = vmatpush2.msra.mxu0 0.0
    %894 = vmatprep.subr.mxu0 0.0
    %895 = vmatpush2.msra.mxu0 0.0
    %896 = vmatprep.subr.mxu0 0.0
    %897 = vmatpush2.msra.mxu0 0.0
    %898 = vmatprep.subr.mxu0 0.0
    %899 = vmatpush2.msra.mxu0 0.0
    %900 = vmatprep.subr.mxu0 0.0
    %901 = vmatpush2.msra.mxu0 0.0
    %902 = vmatprep.subr.mxu0 0.0
    %903 = vmatpush2.msra.mxu0 0.0
    %904 = vmatprep.subr.mxu0 0.0
    %905 = vmatpush2.msra.mxu0 0.0
    %906 = vmatprep.subr.mxu0 0.0
    %907 = vmatpush2.msra.mxu0 0.0
    %908 = vmatprep.subr.mxu0 0.0
    %909 = vmatpush2.msra.mxu0 0.0
    %910 = vmatprep.subr.mxu0 0.0
    %911 = vmatpush2.msra.mxu0 0.0
    %912 = vmatprep.subr.mxu0 0.0
    %913 = vmatpush2.msra.mxu0 0.0
    %914 = vmatprep.subr.mxu0 0.0
    %915 = vmatpush2.msra.mxu0 0.0
    %916 = vmatprep.subr.mxu0 0.0
    %917 = vmatpush2.msra.mxu0 0.0
    %918 = vmatprep.subr.mxu0 0.0
    %919 = vmatpush2.msra.mxu0 0.0
    %920 = vmatprep.subr.mxu0 0.0
    %921 = vmatpush2.msra.mxu0 0.0
    %922 = vmatprep.mubr.f32.mxu0 0.0
    %923 = vmatmul.mubr.f32.gmra.mxu0 %v835
    %v924 = vpop.f32.mrf.mxu0
    %v925 = vadd.f32 0.0, %v924
    %v926 = vpop.f32.mrf.mxu0
    %927 = vmatprep.mubr.f32.mxu0 0.0
    %928 = vmatmul.mubr.f32.gmra.mxu0 %v838
    %v929 = vpop.f32.mrf.mxu0
    %v930 = vadd.f32 0.0, %v929
    %v931 = vpop.f32.mrf.mxu0
    %932 = vmatprep.mubr.f32.mxu0 0.0
    %933 = vmatmul.mubr.f32.gmra.mxu0 %v841
    %v934 = vpop.f32.mrf.mxu0
    %v935 = vadd.f32 0.0, %v934
    %v936 = vpop.f32.mrf.mxu0
    %937 = vmatprep.mubr.f32.mxu0 0.0
    %938 = vmatmul.mubr.f32.gmra.mxu0 %v844
    %v939 = vpop.f32.mrf.mxu0
    %v940 = vadd.f32 0.0, %v939
    %v941 = vpop.f32.mrf.mxu0
    %942 = vmatprep.mubr.f32.mxu0 0.0
    %943 = vmatmul.mubr.f32.gmra.mxu0 %v847
    %v944 = vpop.f32.mrf.mxu0
    %v945 = vadd.f32 0.0, %v944
    %v946 = vpop.f32.mrf.mxu0
    %947 = vmatprep.mubr.f32.mxu0 0.0
    %948 = vmatmul.mubr.f32.gmra.mxu0 %v850
    %v949 = vpop.f32.mrf.mxu0
    %v950 = vadd.f32 0.0, %v949
    %v951 = vpop.f32.mrf.mxu0
    %952 = vmatprep.mubr.f32.mxu0 0.0
    %953 = vmatmul.mubr.f32.gmra.mxu0 %v853
    %v954 = vpop.f32.mrf.mxu0
    %v955 = vadd.f32 0.0, %v954
    %v956 = vpop.f32.mrf.mxu0
    %957 = vmatprep.mubr.f32.mxu0 0.0
    %958 = vmatmul.mubr.f32.gmra.mxu0 %v856
    %v959 = vpop.f32.mrf.mxu0
    %v960 = vadd.f32 0.0, %v959
    %v961 = vpop.f32.mrf.mxu0
    %962 = vdwg.mxu0
    %v963 = vld [vmem:[#allocation2 + $0xb0] sm:$0xff]
    %v964 = vadd.f32 %v925, %v963
    %v965 = vadd.f32 %v930, %v963
    %v966 = vadd.f32 %v935, %v963
    %v967 = vadd.f32 %v940, %v963
    %v968 = vadd.f32 %v945, %v963
    %v969 = vadd.f32 %v950, %v963
    %v970 = vadd.f32 %v955, %v963
    %v971 = vadd.f32 %v960, %v963
    %v972 = vsel %vm85, %v964, -inf
    %v973 = vrot.slane %v972, 4
    %v974 = vmax.f32 %v972, %v973
    %v975 = vrot.slane %v974, 2
    %v976 = vmax.f32 %v974, %v975
    %v977 = vrot.slane %v976, 1
    %v978 = vmax.f32 %v976, %v977
    %v979 = vsel %vm85, %v965, -inf
    %v980 = vrot.slane %v979, 4
    %v981 = vmax.f32 %v979, %v980
    %v982 = vrot.slane %v981, 2
    %v983 = vmax.f32 %v981, %v982
    %v984 = vrot.slane %v983, 1
    %v985 = vmax.f32 %v983, %v984
    %v986 = vsel %vm85, %v966, -inf
    %v987 = vrot.slane %v986, 4
    %v988 = vmax.f32 %v986, %v987
    %v989 = vrot.slane %v988, 2
    %v990 = vmax.f32 %v988, %v989
    %v991 = vrot.slane %v990, 1
    %v992 = vmax.f32 %v990, %v991
    %v993 = vsel %vm85, %v967, -inf
    %v994 = vrot.slane %v993, 4
    %v995 = vmax.f32 %v993, %v994
    %v996 = vrot.slane %v995, 2
    %v997 = vmax.f32 %v995, %v996
    %v998 = vrot.slane %v997, 1
    %v999 = vmax.f32 %v997, %v998
    %v1000 = vsel %vm85, %v968, -inf
    %v1001 = vrot.slane %v1000, 4
    %v1002 = vmax.f32 %v1000, %v1001
    %v1003 = vrot.slane %v1002, 2
    %v1004 = vmax.f32 %v1002, %v1003
    %v1005 = vrot.slane %v1004, 1
    %v1006 = vmax.f32 %v1004, %v1005
    %v1007 = vsel %vm85, %v969, -inf
    %v1008 = vrot.slane %v1007, 4
    %v1009 = vmax.f32 %v1007, %v1008
    %v1010 = vrot.slane %v1009, 2
    %v1011 = vmax.f32 %v1009, %v1010
    %v1012 = vrot.slane %v1011, 1
    %v1013 = vmax.f32 %v1011, %v1012
    %v1014 = vsel %vm85, %v970, -inf
    %v1015 = vrot.slane %v1014, 4
    %v1016 = vmax.f32 %v1014, %v1015
    %v1017 = vrot.slane %v1016, 2
    %v1018 = vmax.f32 %v1016, %v1017
    %v1019 = vrot.slane %v1018, 1
    %v1020 = vmax.f32 %v1018, %v1019
    %v1021 = vsel %vm85, %v971, -inf
    %v1022 = vrot.slane %v1021, 4
    %v1023 = vmax.f32 %v1021, %v1022
    %v1024 = vrot.slane %v1023, 2
    %v1025 = vmax.f32 %v1023, %v1024
    %v1026 = vrot.slane %v1025, 1
    %v1027 = vmax.f32 %v1025, %v1026
    %v1028 = vsub.f32 %v964, %v978
    %v1029 = vsub.f32 %v965, %v985
    %v1030 = vsub.f32 %v966, %v992
    %v1031 = vsub.f32 %v967, %v999
    %v1032 = vsub.f32 %v968, %v1006
    %v1033 = vsub.f32 %v969, %v1013
    %v1034 = vsub.f32 %v970, %v1020
    %v1035 = vsub.f32 %v971, %v1027
    %v1036 = vmul.f32 %v1028, 1.442695
    %v1037 = vpow.pop %v1036
    %v1038 = vmul.f32 %v1029, 1.442695
    %v1039 = vpow.pop %v1038
    %v1040 = vmul.f32 %v1030, 1.442695
    %v1041 = vpow.pop %v1040
    %v1042 = vmul.f32 %v1031, 1.442695
    %v1043 = vpow.pop %v1042
    %v1044 = vmul.f32 %v1032, 1.442695
    %v1045 = vpow.pop %v1044
    %v1046 = vmul.f32 %v1033, 1.442695
    %v1047 = vpow.pop %v1046
    %v1048 = vmul.f32 %v1034, 1.442695
    %v1049 = vpow.pop %v1048
    %v1050 = vmul.f32 %v1035, 1.442695
    %v1051 = vpow.pop %v1050
    %v1052 = vsel %vm85, %v1037, 0.0
    %v1053 = vrot.slane %v1052, 4
    %v1054 = vadd.f32 %v1052, %v1053
    %v1055 = vrot.slane %v1054, 2
    %v1056 = vadd.f32 %v1054, %v1055
    %v1057 = vrot.slane %v1056, 1
    %v1058 = vadd.f32 %v1056, %v1057
    %v1059 = vsel %vm85, %v1039, 0.0
    %v1060 = vrot.slane %v1059, 4
    %v1061 = vadd.f32 %v1059, %v1060
    %v1062 = vrot.slane %v1061, 2
    %v1063 = vadd.f32 %v1061, %v1062
    %v1064 = vrot.slane %v1063, 1
    %v1065 = vadd.f32 %v1063, %v1064
    %v1066 = vsel %vm85, %v1041, 0.0
    %v1067 = vrot.slane %v1066, 4
    %v1068 = vadd.f32 %v1066, %v1067
    %v1069 = vrot.slane %v1068, 2
    %v1070 = vadd.f32 %v1068, %v1069
    %v1071 = vrot.slane %v1070, 1
    %v1072 = vadd.f32 %v1070, %v1071
    %v1073 = vsel %vm85, %v1043, 0.0
    %v1074 = vrot.slane %v1073, 4
    %v1075 = vadd.f32 %v1073, %v1074
    %v1076 = vrot.slane %v1075, 2
    %v1077 = vadd.f32 %v1075, %v1076
    %v1078 = vrot.slane %v1077, 1
    %v1079 = vadd.f32 %v1077, %v1078
    %v1080 = vsel %vm85, %v1045, 0.0
    %v1081 = vrot.slane %v1080, 4
    %v1082 = vadd.f32 %v1080, %v1081
    %v1083 = vrot.slane %v1082, 2
    %v1084 = vadd.f32 %v1082, %v1083
    %v1085 = vrot.slane %v1084, 1
    %v1086 = vadd.f32 %v1084, %v1085
    %v1087 = vsel %vm85, %v1047, 0.0
    %v1088 = vrot.slane %v1087, 4
    %v1089 = vadd.f32 %v1087, %v1088
    %v1090 = vrot.slane %v1089, 2
    %v1091 = vadd.f32 %v1089, %v1090
    %v1092 = vrot.slane %v1091, 1
    %v1093 = vadd.f32 %v1091, %v1092
    %v1094 = vsel %vm85, %v1049, 0.0
    %v1095 = vrot.slane %v1094, 4
    %v1096 = vadd.f32 %v1094, %v1095
    %v1097 = vrot.slane %v1096, 2
    %v1098 = vadd.f32 %v1096, %v1097
    %v1099 = vrot.slane %v1098, 1
    %v1100 = vadd.f32 %v1098, %v1099
    %v1101 = vsel %vm85, %v1051, 0.0
    %v1102 = vrot.slane %v1101, 4
    %v1103 = vadd.f32 %v1101, %v1102
    %v1104 = vrot.slane %v1103, 2
    %v1105 = vadd.f32 %v1103, %v1104
    %v1106 = vrot.slane %v1105, 1
    %v1107 = vadd.f32 %v1105, %v1106
    %v1108 = vrcp.pop %v1058
    %v1109 = vrcp.pop %v1065
    %v1110 = vrcp.pop %v1072
    %v1111 = vrcp.pop %v1079
    %v1112 = vrcp.pop %v1086
    %v1113 = vrcp.pop %v1093
    %v1114 = vrcp.pop %v1100
    %v1115 = vrcp.pop %v1107
    %v1116 = vmul.f32 %v1037, %v696
    %v1117 = vmul.f32 %v1039, %v701
    %v1118 = vmul.f32 %v1041, %v706
    %v1119 = vmul.f32 %v1043, %v711
    %v1120 = vmul.f32 %v1045, %v716
    %v1121 = vmul.f32 %v1047, %v721
    %v1122 = vmul.f32 %v1049, %v726
    %v1123 = vmul.f32 %v1051, %v731
    %v1124 = vsel %vm85, %v1116, 0.0
    %v1125 = vrot.slane %v1124, 4
    %v1126 = vadd.f32 %v1124, %v1125
    %v1127 = vrot.slane %v1126, 2
    %v1128 = vadd.f32 %v1126, %v1127
    %v1129 = vrot.slane %v1128, 1
    %v1130 = vadd.f32 %v1128, %v1129
    %v1131 = vsel %vm85, %v1117, 0.0
    %v1132 = vrot.slane %v1131, 4
    %v1133 = vadd.f32 %v1131, %v1132
    %v1134 = vrot.slane %v1133, 2
    %v1135 = vadd.f32 %v1133, %v1134
    %v1136 = vrot.slane %v1135, 1
    %v1137 = vadd.f32 %v1135, %v1136
    %v1138 = vsel %vm85, %v1118, 0.0
    %v1139 = vrot.slane %v1138, 4
    %v1140 = vadd.f32 %v1138, %v1139
    %v1141 = vrot.slane %v1140, 2
    %v1142 = vadd.f32 %v1140, %v1141
    %v1143 = vrot.slane %v1142, 1
    %v1144 = vadd.f32 %v1142, %v1143
    %v1145 = vsel %vm85, %v1119, 0.0
    %v1146 = vrot.slane %v1145, 4
    %v1147 = vadd.f32 %v1145, %v1146
    %v1148 = vrot.slane %v1147, 2
    %v1149 = vadd.f32 %v1147, %v1148
    %v1150 = vrot.slane %v1149, 1
    %v1151 = vadd.f32 %v1149, %v1150
    %v1152 = vsel %vm85, %v1120, 0.0
    %v1153 = vrot.slane %v1152, 4
    %v1154 = vadd.f32 %v1152, %v1153
    %v1155 = vrot.slane %v1154, 2
    %v1156 = vadd.f32 %v1154, %v1155
    %v1157 = vrot.slane %v1156, 1
    %v1158 = vadd.f32 %v1156, %v1157
    %v1159 = vsel %vm85, %v1121, 0.0
    %v1160 = vrot.slane %v1159, 4
    %v1161 = vadd.f32 %v1159, %v1160
    %v1162 = vrot.slane %v1161, 2
    %v1163 = vadd.f32 %v1161, %v1162
    %v1164 = vrot.slane %v1163, 1
    %v1165 = vadd.f32 %v1163, %v1164
    %v1166 = vsel %vm85, %v1122, 0.0
    %v1167 = vrot.slane %v1166, 4
    %v1168 = vadd.f32 %v1166, %v1167
    %v1169 = vrot.slane %v1168, 2
    %v1170 = vadd.f32 %v1168, %v1169
    %v1171 = vrot.slane %v1170, 1
    %v1172 = vadd.f32 %v1170, %v1171
    %v1173 = vsel %vm85, %v1123, 0.0
    %v1174 = vrot.slane %v1173, 4
    %v1175 = vadd.f32 %v1173, %v1174
    %v1176 = vrot.slane %v1175, 2
    %v1177 = vadd.f32 %v1175, %v1176
    %v1178 = vrot.slane %v1177, 1
    %v1179 = vadd.f32 %v1177, %v1178
    %v1180 = vmul.f32 %v1130, %v1108
    %v1181 = vmul.f32 %v1137, %v1109
    %v1182 = vmul.f32 %v1144, %v1110
    %v1183 = vmul.f32 %v1151, %v1111
    %v1184 = vmul.f32 %v1158, %v1112
    %v1185 = vmul.f32 %v1165, %v1113
    %v1186 = vmul.f32 %v1172, %v1114
    %v1187 = vmul.f32 %v1179, %v1115
    %v1188 = vld [vmem:[#allocation2 + $0x50] sm:$0xff]
    %v1189 = vld [vmem:[#allocation2 + $0x58] sm:$0xff]
    %v1190 = vld [vmem:[#allocation2 + $0xbc] sm:$0x1]
    %v1191 = vlaneseq
    %v1192 = vshrl.u32 %v1191, 7
    %v1193 = vsub.s32 0, %v1192
    %v1194 = vrot.slane %v1190, %v1193
    %vm1203 = vcmask 1041409
    %v1204 = vsel %vm1203, %v1181, %v1180
    %vm1205 = vcmask 1042434
    %v1206 = vsel %vm1205, %v1182, %v1204
    %vm1207 = vcmask 1043459
    %v1208 = vsel %vm1207, %v1183, %v1206
    %vm1209 = vcmask 1044484
    %v1210 = vsel %vm1209, %v1184, %v1208
    %vm1211 = vcmask 1045509
    %v1212 = vsel %vm1211, %v1185, %v1210
    %vm1213 = vcmask 1046534
    %v1214 = vsel %vm1213, %v1186, %v1212
    %vm1215 = vcmask 1047559
    %v1216 = vsel %vm1215, %v1187, %v1214
    %v1217 = vsel %vm85, %v1216, 0
    %1219 = vmatprep.subr.mxu0 0.0
    %1220 = vmatpush1.msra.mxu0 0.0
    %1221 = vmatprep.subr.mxu0 0.0
    %1222 = vmatpush1.msra.mxu0 0.0
    %1223 = vmatprep.subr.mxu0 0.0
    %1224 = vmatpush1.msra.mxu0 0.0
    %1225 = vmatprep.subr.mxu0 0.0
    %1226 = vmatpush1.msra.mxu0 0.0
    %1227 = vmatprep.subr.mxu0 0.0
    %1228 = vmatpush1.msra.mxu0 0.0
    %1229 = vmatprep.subr.mxu0 0.0
    %1230 = vmatpush1.msra.mxu0 0.0
    %1231 = vmatprep.subr.mxu0 0.0
    %1232 = vmatpush1.msra.mxu0 0.0
    %1233 = vmatprep.subr.mxu0 0.0
    %1234 = vmatpush1.msra.mxu0 0.0
    %1235 = vmatprep.subr.mxu0 0.0
    %1236 = vmatpush1.msra.mxu0 0.0
    %1237 = vmatprep.subr.mxu0 0.0
    %1238 = vmatpush1.msra.mxu0 0.0
    %1239 = vmatprep.subr.mxu0 0.0
    %1240 = vmatpush1.msra.mxu0 0.0
    %1241 = vmatprep.subr.mxu0 0.0
    %1242 = vmatpush1.msra.mxu0 0.0
    %1243 = vmatprep.subr.mxu0 0.0
    %1244 = vmatpush1.msra.mxu0 0.0
    %1245 = vmatprep.subr.mxu0 0.0
    %1246 = vmatpush1.msra.mxu0 0.0
    %1247 = vmatprep.subr.mxu0 0.0
    %1248 = vmatpush1.msra.mxu0 %v1189
    %1249 = vmatprep.subr.mxu0 0.0
    %1250 = vmatpush1.msra.mxu0 %v1188
    %1251 = vmatprep.subr.mxu0 0.0
    %1252 = vmatpush2.msra.mxu0 0.0
    %1253 = vmatprep.subr.mxu0 0.0
    %1254 = vmatpush2.msra.mxu0 0.0
    %1255 = vmatprep.subr.mxu0 0.0
    %1256 = vmatpush2.msra.mxu0 0.0
    %1257 = vmatprep.subr.mxu0 0.0
    %1258 = vmatpush2.msra.mxu0 0.0
    %1259 = vmatprep.subr.mxu0 0.0
    %1260 = vmatpush2.msra.mxu0 0.0
    %1261 = vmatprep.subr.mxu0 0.0
    %1262 = vmatpush2.msra.mxu0 0.0
    %1263 = vmatprep.subr.mxu0 0.0
    %1264 = vmatpush2.msra.mxu0 0.0
    %1265 = vmatprep.subr.mxu0 0.0
    %1266 = vmatpush2.msra.mxu0 0.0
    %1267 = vmatprep.subr.mxu0 0.0
    %1268 = vmatpush2.msra.mxu0 0.0
    %1269 = vmatprep.subr.mxu0 0.0
    %1270 = vmatpush2.msra.mxu0 0.0
    %1271 = vmatprep.subr.mxu0 0.0
    %1272 = vmatpush2.msra.mxu0 0.0
    %1273 = vmatprep.subr.mxu0 0.0
    %1274 = vmatpush2.msra.mxu0 0.0
    %1275 = vmatprep.subr.mxu0 0.0
    %1276 = vmatpush2.msra.mxu0 0.0
    %1277 = vmatprep.subr.mxu0 0.0
    %1278 = vmatpush2.msra.mxu0 0.0
    %1279 = vmatprep.subr.mxu0 0.0
    %1280 = vmatpush2.msra.mxu0 0.0
    %1281 = vmatprep.subr.mxu0 0.0
    %1282 = vmatpush2.msra.mxu0 0.0
    %1283 = vmatprep.mubr.f32.mxu0 0.0
    %1284 = vmatmul.mubr.f32.gmra.mxu0 %v1217
    %v1285 = vpop.f32.mrf.mxu0
    %v1286 = vadd.f32 %v1194, %v1285
    %v1287 = vpop.f32.mrf.mxu0
    %1288 = vdwg.mxu0
    %v1289 = vadd.f32 %v405, %v1286
    %v1290 = vld [vmem:[#allocation2 + $0xbf] sm:$0x1]
    %v1291 = vld [vmem:[#allocation2 + $0xc0] sm:$0x1]
    %v1292 = vsel %vm85, %v1289, 0.0
    %1293 = vadd.xlane.f32.xlu0 %v1292
    %v1294 = vpop.xlane.xlu0 %1293
    %v1295 = vmul.f32 %v1294, %v385
    %v1296 = vsub.f32 %v1289, %v1295
    %v1297 = vmul.f32 %v1296, %v1296
    %v1298 = vsel %vm85, %v1297, 0.0
    %1299 = vadd.xlane.f32.xlu0 %v1298
    %v1300 = vpop.xlane.xlu0 %1299
    %v1301 = vmul.f32 %v1300, %v385
    %v1302 = vadd.f32 %v1301, 1e-05
    %v1303 = vrsqrt.pop %v1302
    %v1304 = vmul.f32 %v1296, %v1303
    %v1305 = vlaneseq
    %v1306 = vshrl.u32 %v1305, 7
    %v1307 = vsub.s32 0, %v1306
    %v1308 = vrot.slane %v1290, %v1307
    %v1309 = vmul.f32 %v1304, %v1308
    %v1310 = vlaneseq
    %v1311 = vshrl.u32 %v1310, 7
    %v1312 = vsub.s32 0, %v1311
    %v1313 = vrot.slane %v1291, %v1312
    %v1314 = vadd.f32 %v1309, %v1313
    %v1315 = vld [vmem:[#allocation2 + $0x60] sm:$0xff]
    %v1316 = vld [vmem:[#allocation2 + $0x68] sm:$0xff]
    %v1317 = vld [vmem:[#allocation2 + $0xc3] sm:$0x1]
    %v1318 = vlaneseq
    %v1319 = vshrl.u32 %v1318, 7
    %v1320 = vsub.s32 0, %v1319
    %v1321 = vrot.slane %v1317, %v1320
    %v1323 = vsel %vm85, %v1314, 0
    %1325 = vmatprep.subr.mxu0 0.0
    %1326 = vmatpush1.msra.mxu0 0.0
    %1327 = vmatprep.subr.mxu0 0.0
    %1328 = vmatpush1.msra.mxu0 0.0
    %1329 = vmatprep.subr.mxu0 0.0
    %1330 = vmatpush1.msra.mxu0 0.0
    %1331 = vmatprep.subr.mxu0 0.0
    %1332 = vmatpush1.msra.mxu0 0.0
    %1333 = vmatprep.subr.mxu0 0.0
    %1334 = vmatpush1.msra.mxu0 0.0
    %1335 = vmatprep.subr.mxu0 0.0
    %1336 = vmatpush1.msra.mxu0 0.0
    %1337 = vmatprep.subr.mxu0 0.0
    %1338 = vmatpush1.msra.mxu0 0.0
    %1339 = vmatprep.subr.mxu0 0.0
    %1340 = vmatpush1.msra.mxu0 0.0
    %1341 = vmatprep.subr.mxu0 0.0
    %1342 = vmatpush1.msra.mxu0 0.0
    %1343 = vmatprep.subr.mxu0 0.0
    %1344 = vmatpush1.msra.mxu0 0.0
    %1345 = vmatprep.subr.mxu0 0.0
    %1346 = vmatpush1.msra.mxu0 0.0
    %1347 = vmatprep.subr.mxu0 0.0
    %1348 = vmatpush1.msra.mxu0 0.0
    %1349 = vmatprep.subr.mxu0 0.0
    %1350 = vmatpush1.msra.mxu0 0.0
    %1351 = vmatprep.subr.mxu0 0.0
    %1352 = vmatpush1.msra.mxu0 0.0
    %1353 = vmatprep.subr.mxu0 0.0
    %1354 = vmatpush1.msra.mxu0 %v1316
    %1355 = vmatprep.subr.mxu0 0.0
    %1356 = vmatpush1.msra.mxu0 %v1315
    %1357 = vmatprep.subr.mxu0 0.0
    %1358 = vmatpush2.msra.mxu0 0.0
    %1359 = vmatprep.subr.mxu0 0.0
    %1360 = vmatpush2.msra.mxu0 0.0
    %1361 = vmatprep.subr.mxu0 0.0
    %1362 = vmatpush2.msra.mxu0 0.0
    %1363 = vmatprep.subr.mxu0 0.0
    %1364 = vmatpush2.msra.mxu0 0.0
    %1365 = vmatprep.subr.mxu0 0.0
    %1366 = vmatpush2.msra.mxu0 0.0
    %1367 = vmatprep.subr.mxu0 0.0
    %1368 = vmatpush2.msra.mxu0 0.0
    %1369 = vmatprep.subr.mxu0 0.0
    %1370 = vmatpush2.msra.mxu0 0.0
    %1371 = vmatprep.subr.mxu0 0.0
    %1372 = vmatpush2.msra.mxu0 0.0
    %1373 = vmatprep.subr.mxu0 0.0
    %1374 = vmatpush2.msra.mxu0 0.0
    %1375 = vmatprep.subr.mxu0 0.0
    %1376 = vmatpush2.msra.mxu0 0.0
    %1377 = vmatprep.subr.mxu0 0.0
    %1378 = vmatpush2.msra.mxu0 0.0
    %1379 = vmatprep.subr.mxu0 0.0
    %1380 = vmatpush2.msra.mxu0 0.0
    %1381 = vmatprep.subr.mxu0 0.0
    %1382 = vmatpush2.msra.mxu0 0.0
    %1383 = vmatprep.subr.mxu0 0.0
    %1384 = vmatpush2.msra.mxu0 0.0
    %1385 = vmatprep.subr.mxu0 0.0
    %1386 = vmatpush2.msra.mxu0 0.0
    %1387 = vmatprep.subr.mxu0 0.0
    %1388 = vmatpush2.msra.mxu0 0.0
    %1389 = vmatprep.mubr.f32.mxu0 0.0
    %1390 = vmatmul.mubr.f32.gmra.mxu0 %v1323
    %v1391 = vpop.f32.mrf.mxu0
    %v1392 = vadd.f32 %v1321, %v1391
    %v1393 = vpop.f32.mrf.mxu0
    %1394 = vdwg.mxu0
    %v1395 = vmax.f32 %v1392, 0.0
    %v1396 = vld [vmem:[#allocation2 + $0x70] sm:$0xff]
    %v1397 = vld [vmem:[#allocation2 + $0x78] sm:$0xff]
    %v1398 = vld [vmem:[#allocation2 + $0xc4] sm:$0x1]
    %v1399 = vlaneseq
    %v1400 = vshrl.u32 %v1399, 7
    %v1401 = vsub.s32 0, %v1400
    %v1402 = vrot.slane %v1398, %v1401
    %v1404 = vsel %vm85, %v1395, 0
    %1406 = vmatprep.subr.mxu0 0.0
    %1407 = vmatpush1.msra.mxu0 0.0
    %1408 = vmatprep.subr.mxu0 0.0
    %1409 = vmatpush1.msra.mxu0 0.0
    %1410 = vmatprep.subr.mxu0 0.0
    %1411 = vmatpush1.msra.mxu0 0.0
    %1412 = vmatprep.subr.mxu0 0.0
    %1413 = vmatpush1.msra.mxu0 0.0
    %1414 = vmatprep.subr.mxu0 0.0
    %1415 = vmatpush1.msra.mxu0 0.0
    %1416 = vmatprep.subr.mxu0 0.0
    %1417 = vmatpush1.msra.mxu0 0.0
    %1418 = vmatprep.subr.mxu0 0.0
    %1419 = vmatpush1.msra.mxu0 0.0
    %1420 = vmatprep.subr.mxu0 0.0
    %1421 = vmatpush1.msra.mxu0 0.0
    %1422 = vmatprep.subr.mxu0 0.0
    %1423 = vmatpush1.msra.mxu0 0.0
    %1424 = vmatprep.subr.mxu0 0.0
    %1425 = vmatpush1.msra.mxu0 0.0
    %1426 = vmatprep.subr.mxu0 0.0
    %1427 = vmatpush1.msra.mxu0 0.0
    %1428 = vmatprep.subr.mxu0 0.0
    %1429 = vmatpush1.msra.mxu0 0.0
    %1430 = vmatprep.subr.mxu0 0.0
    %1431 = vmatpush1.msra.mxu0 0.0
    %1432 = vmatprep.subr.mxu0 0.0
    %1433 = vmatpush1.msra.mxu0 0.0
    %1434 = vmatprep.subr.mxu0 0.0
    %1435 = vmatpush1.msra.mxu0 %v1397
    %1436 = vmatprep.subr.mxu0 0.0
    %1437 = vmatpush1.msra.mxu0 %v1396
    %1438 = vmatprep.subr.mxu0 0.0
    %1439 = vmatpush2.msra.mxu0 0.0
    %1440 = vmatprep.subr.mxu0 0.0
    %1441 = vmatpush2.msra.mxu0 0.0
    %1442 = vmatprep.subr.mxu0 0.0
    %1443 = vmatpush2.msra.mxu0 0.0
    %1444 = vmatprep.subr.mxu0 0.0
    %1445 = vmatpush2.msra.mxu0 0.0
    %1446 = vmatprep.subr.mxu0 0.0
    %1447 = vmatpush2.msra.mxu0 0.0
    %1448 = vmatprep.subr.mxu0 0.0
    %1449 = vmatpush2.msra.mxu0 0.0
    %1450 = vmatprep.subr.mxu0 0.0
    %1451 = vmatpush2.msra.mxu0 0.0
    %1452 = vmatprep.subr.mxu0 0.0
    %1453 = vmatpush2.msra.mxu0 0.0
    %1454 = vmatprep.subr.mxu0 0.0
    %1455 = vmatpush2.msra.mxu0 0.0
    %1456 = vmatprep.subr.mxu0 0.0
    %1457 = vmatpush2.msra.mxu0 0.0
    %1458 = vmatprep.subr.mxu0 0.0
    %1459 = vmatpush2.msra.mxu0 0.0
    %1460 = vmatprep.subr.mxu0 0.0
    %1461 = vmatpush2.msra.mxu0 0.0
    %1462 = vmatprep.subr.mxu0 0.0
    %1463 = vmatpush2.msra.mxu0 0.0
    %1464 = vmatprep.subr.mxu0 0.0
    %1465 = vmatpush2.msra.mxu0 0.0
    %1466 = vmatprep.subr.mxu0 0.0
    %1467 = vmatpush2.msra.mxu0 0.0
    %1468 = vmatprep.subr.mxu0 0.0
    %1469 = vmatpush2.msra.mxu0 0.0
    %1470 = vmatprep.mubr.f32.mxu0 0.0
    %1471 = vmatmul.mubr.f32.gmra.mxu0 %v1404
    %v1472 = vpop.f32.mrf.mxu0
    %v1473 = vadd.f32 %v1402, %v1472
    %v1474 = vpop.f32.mrf.mxu0
    %1475 = vdwg.mxu0
    %v1476 = vadd.f32 %v1314, %v1473
    %v1477 = vld [vmem:[#allocation2 + $0xc1] sm:$0x1]
    %v1478 = vld [vmem:[#allocation2 + $0xc2] sm:$0x1]
    %v1479 = vsel %vm85, %v1476, 0.0
    %1480 = vadd.xlane.f32.xlu0 %v1479
    %v1481 = vpop.xlane.xlu0 %1480
    %v1482 = vmul.f32 %v1481, %v385
    %v1483 = vsub.f32 %v1476, %v1482
    %v1484 = vmul.f32 %v1483, %v1483
    %v1485 = vsel %vm85, %v1484, 0.0
    %1486 = vadd.xlane.f32.xlu0 %v1485
    %v1487 = vpop.xlane.xlu0 %1486
    %v1488 = vmul.f32 %v1487, %v385
    %v1489 = vadd.f32 %v1488, 1e-05
    %v1490 = vrsqrt.pop %v1489
    %v1491 = vmul.f32 %v1483, %v1490
    %v1492 = vlaneseq
    %v1493 = vshrl.u32 %v1492, 7
    %v1494 = vsub.s32 0, %v1493
    %v1495 = vrot.slane %v1477, %v1494
    %v1496 = vmul.f32 %v1491, %v1495
    %v1497 = vlaneseq
    %v1498 = vshrl.u32 %v1497, 7
    %v1499 = vsub.s32 0, %v1498
    %v1500 = vrot.slane %v1478, %v1499
    %v1501 = vadd.f32 %v1496, %v1500
    %v1502 = vld [vmem:[#allocation2 + $0x80] sm:$0xff]
    %v1503 = vld [vmem:[#allocation2 + $0x88] sm:$0xff]
    %v1504 = vld [vmem:[#allocation2 + $0xc5] sm:$0x1]
    %v1505 = vlaneseq
    %v1506 = vshrl.u32 %v1505, 7
    %v1507 = vsub.s32 0, %v1506
    %v1508 = vrot.slane %v1504, %v1507
    %v1510 = vsel %vm85, %v1501, 0
    %1512 = vmatprep.subr.mxu0 0.0
    %1513 = vmatpush1.msra.mxu0 0.0
    %1514 = vmatprep.subr.mxu0 0.0
    %1515 = vmatpush1.msra.mxu0 0.0
    %1516 = vmatprep.subr.mxu0 0.0
    %1517 = vmatpush1.msra.mxu0 0.0
    %1518 = vmatprep.subr.mxu0 0.0
    %1519 = vmatpush1.msra.mxu0 0.0
    %1520 = vmatprep.subr.mxu0 0.0
    %1521 = vmatpush1.msra.mxu0 0.0
    %1522 = vmatprep.subr.mxu0 0.0
    %1523 = vmatpush1.msra.mxu0 0.0
    %1524 = vmatprep.subr.mxu0 0.0
    %1525 = vmatpush1.msra.mxu0 0.0
    %1526 = vmatprep.subr.mxu0 0.0
    %1527 = vmatpush1.msra.mxu0 0.0
    %1528 = vmatprep.subr.mxu0 0.0
    %1529 = vmatpush1.msra.mxu0 0.0
    %1530 = vmatprep.subr.mxu0 0.0
    %1531 = vmatpush1.msra.mxu0 0.0
    %1532 = vmatprep.subr.mxu0 0.0
    %1533 = vmatpush1.msra.mxu0 0.0
    %1534 = vmatprep.subr.mxu0 0.0
    %1535 = vmatpush1.msra.mxu0 0.0
    %1536 = vmatprep.subr.mxu0 0.0
    %1537 = vmatpush1.msra.mxu0 0.0
    %1538 = vmatprep.subr.mxu0 0.0
    %1539 = vmatpush1.msra.mxu0 0.0
    %1540 = vmatprep.subr.mxu0 0.0
    %1541 = vmatpush1.msra.mxu0 %v1503
    %1542 = vmatprep.subr.mxu0 0.0
    %1543 = vmatpush1.msra.mxu0 %v1502
    %1544 = vmatprep.subr.mxu0 0.0
    %1545 = vmatpush2.msra.mxu0 0.0
    %1546 = vmatprep.subr.mxu0 0.0
    %1547 = vmatpush2.msra.mxu0 0.0
    %1548 = vmatprep.subr.mxu0 0.0
    %1549 = vmatpush2.msra.mxu0 0.0
    %1550 = vmatprep.subr.mxu0 0.0
    %1551 = vmatpush2.msra.mxu0 0.0
    %1552 = vmatprep.subr.mxu0 0.0
    %1553 = vmatpush2.msra.mxu0 0.0
    %1554 = vmatprep.subr.mxu0 0.0
    %1555 = vmatpush2.msra.mxu0 0.0
    %1556 = vmatprep.subr.mxu0 0.0
    %1557 = vmatpush2.msra.mxu0 0.0
    %1558 = vmatprep.subr.mxu0 0.0
    %1559 = vmatpush2.msra.mxu0 0.0
    %1560 = vmatprep.subr.mxu0 0.0
    %1561 = vmatpush2.msra.mxu0 0.0
    %1562 = vmatprep.subr.mxu0 0.0
    %1563 = vmatpush2.msra.mxu0 0.0
    %1564 = vmatprep.subr.mxu0 0.0
    %1565 = vmatpush2.msra.mxu0 0.0
    %1566 = vmatprep.subr.mxu0 0.0
    %1567 = vmatpush2.msra.mxu0 0.0
    %1568 = vmatprep.subr.mxu0 0.0
    %1569 = vmatpush2.msra.mxu0 0.0
    %1570 = vmatprep.subr.mxu0 0.0
    %1571 = vmatpush2.msra.mxu0 0.0
    %1572 = vmatprep.subr.mxu0 0.0
    %1573 = vmatpush2.msra.mxu0 0.0
    %1574 = vmatprep.subr.mxu0 0.0
    %1575 = vmatpush2.msra.mxu0 0.0
    %1576 = vmatprep.mubr.f32.mxu0 0.0
    %1577 = vmatmul.mubr.f32.gmra.mxu0 %v1510
    %v1578 = vpop.f32.mrf.mxu0
    %v1579 = vadd.f32 %v1508, %v1578
    %v1580 = vpop.f32.mrf.mxu0
    %1581 = vdwg.mxu0
    %1582 = vst [vmem:[%s2] sm:$0xff] %v1579
    // Predicated region
    $region14: #{gpt_predictor_forward.1} parent=1 // pred_check
      _
    $region15: #{gpt_predictor_forward.1} parent=1 // pred_check_branch
      %1584 = sbr.rel (0) target = $region17
    $region16: #{gpt_predictor_forward.1} parent=1 // pred_region
      _
    $region17: #{gpt_predictor_forward.1} parent=1 // pred_fallthru
      _
    // Predicated region
    $region18: #{gpt_predictor_forward.1} parent=1 // pred_check
      _
    $region19: #{gpt_predictor_forward.1} parent=1 // pred_check_branch
      %1586 = sbr.rel (0) target = $region21
    $region20: #{gpt_predictor_forward.1} parent=1 // pred_region
      _
    $region21: #{gpt_predictor_forward.1} parent=1 // pred_fallthru
      _
    %1587 = vsyncpa [#allocation3], 1

</llo_original>
